<compile_context>
chip_gen: v7x
topology: tpu7x:2x2x1
jax: 0.10.0
libtpu: 0.0.40
codegen_flags: <defaults>
</compile_context>

<pallas_src>
import numpy as np
import jax
import jax.numpy as jnp
from jax.experimental import pallas as pl
from jax.experimental.pallas import tpu as pltpu


# ---------------------------------------------------------------------------
# Host-side (static) precompute
# ---------------------------------------------------------------------------
def _calculate_birds_eye_view_parameters(xbound, ybound, zbound):
    """Mirror of UniAD's calculate_birds_eye_view_parameters (numpy)."""
    bounds = [xbound, ybound, zbound]
    resolution = np.array([b[2] for b in bounds], dtype=np.float64)
    start_position = np.array([b[0] + b[2] / 2.0 for b in bounds], dtype=np.float64)
    dimension = np.array([(b[1] - b[0]) / b[2] for b in bounds], dtype=np.int64)
    return resolution, start_position, dimension


def _interp_matrix(norm_coords, in_size):
    """1-D interpolation matrix for grid_sample(mode='bilinear',
    align_corners=True, padding_mode='zeros').  Row k holds the <=2 taps for
    output sample k; out-of-range taps are left at 0 (zero padding)."""
    pos = (np.asarray(norm_coords, np.float64) + 1.0) * 0.5 * (in_size - 1)
    i0 = np.floor(pos).astype(np.int64)
    i1 = i0 + 1
    w1 = (pos - i0).astype(np.float32)
    w0 = (1.0 - w1).astype(np.float32)
    out_size = pos.shape[0]
    m = np.zeros((out_size, in_size), dtype=np.float32)
    rows = np.arange(out_size)
    v0 = (i0 >= 0) & (i0 < in_size)
    v1 = (i1 >= 0) & (i1 < in_size)
    m[rows[v0], i0[v0]] += w0[v0]
    m[rows[v1], i1[v1]] += w1[v1]
    return m


def _round_up(n, m):
    return ((n + m - 1) // m) * m


# ---------------------------------------------------------------------------
# Pallas kernel
# ---------------------------------------------------------------------------
def _bev_slicer_kernel(x_ref, wy_ref, wxt_ref, out_ref):
    """One tile of rows (rows = flattened batch*channel BEV planes).

    x_ref:   (TR, H_in, W_in)   input planes (compute dtype)
    wy_ref:  (H_out, H_in)      height-interp matrix (compute dtype)
    wxt_ref: (W_in, W_pad)      width-interp matrix, transposed, zero-padded
                                so W_pad is a multiple of 128 (lane-dense)
    out_ref: (TR, H_out, W_pad)
    """
    TR, H_in, W_in = x_ref.shape
    H_out = wy_ref.shape[0]
    W_pad = wxt_ref.shape[1]

    # 1) Width interpolation first: one big dense matmul, M = TR*H_in rows
    #    (sublane-dense), N = W_pad (lane-dense), K = W_in.
    x2 = x_ref[...].reshape(TR * H_in, W_in)
    t = jnp.dot(x2, wxt_ref[...],
                preferred_element_type=jnp.float32)              # (TR*H_in, W_pad)

    # 2) Height interpolation: batched matmul over the row tile.  Wy is
    #    broadcast in-registers right before the contraction; it is never
    #    materialized per-channel in HBM or VMEM.
    t3 = t.reshape(TR, H_in, W_pad).astype(wy_ref.dtype)
    wy_b = jnp.broadcast_to(wy_ref[...][None, :, :], (TR, H_out, H_in))
    o = jnp.einsum('roh,rhw->row', wy_b, t3,
                   preferred_element_type=jnp.float32)           # (TR, H_out, W_pad)

    out_ref[...] = o.astype(out_ref.dtype)


# ---------------------------------------------------------------------------
# Wrapper
# ---------------------------------------------------------------------------
def _bev_slice_forward(x, norm_map_y, norm_map_x, *, compute_dtype=None,
                       row_tile=None):
    B, C, H_in, W_in = x.shape
    out_dtype = x.dtype
    compute_dtype = jnp.dtype(compute_dtype if compute_dtype is not None else x.dtype)

    wy = _interp_matrix(norm_map_y, H_in)              # (H_out, H_in)
    wx = _interp_matrix(norm_map_x, W_in)              # (W_out, W_in)
    H_out, W_out = wy.shape[0], wx.shape[0]
    W_pad = _round_up(W_out, 128)                      # lane-dense output stores

    wxt_pad = np.zeros((W_in, W_pad), np.float32)
    wxt_pad[:, :W_out] = wx.T
    wy_d = jnp.asarray(wy, compute_dtype)
    wxt_d = jnp.asarray(wxt_pad, compute_dtype)

    # Fold batch and channels into one independent "row" axis and tile it.
    n_rows = B * C
    x_rows = x.reshape(n_rows, H_in, W_in).astype(compute_dtype)

    # Row tile: biggest divisor of n_rows whose (input + output) tiles stay
    # around 16 MiB, so double-buffered blocks fit every TPU generation's VMEM
    # (v7x 64 MiB physical being the tightest).  Tiny shapes collapse to a
    # single fused grid step (small-shape fast path).
    bytes_per_row = (H_in * W_in * compute_dtype.itemsize
                     + H_out * W_pad * jnp.dtype(out_dtype).itemsize)
    if row_tile is None:
        budget = 16 << 20
        max_rows = max(1, budget // max(bytes_per_row, 1))
        row_tile = 1
        for d in range(1, n_rows + 1):
            if n_rows % d == 0 and d <= max_rows:
                row_tile = d
    assert n_rows % row_tile == 0, (n_rows, row_tile)
    grid = (n_rows // row_tile,)

    weight_bytes = (wy_d.size + wxt_d.size) * compute_dtype.itemsize
    vmem_needed = 2 * row_tile * bytes_per_row + weight_bytes + (4 << 20)
    vmem_limit = int(min(56 << 20, max(vmem_needed, 32 << 20)))

    def _build_call(single_buffer_weights):
        def const_spec(shape):
            idx = (lambda i: (0,) * len(shape))
            if single_buffer_weights:
                # Weights never change across grid steps -> single-buffer.
                return pl.BlockSpec(shape, idx, pipeline_mode=pl.Buffered(1))
            return pl.BlockSpec(shape, idx)

        return pl.pallas_call(
            _bev_slicer_kernel,
            out_shape=jax.ShapeDtypeStruct((n_rows, H_out, W_pad), out_dtype),
            grid=grid,
            in_specs=[
                pl.BlockSpec((row_tile, H_in, W_in), lambda i: (i, 0, 0)),
                const_spec((H_out, H_in)),
                const_spec((W_in, W_pad)),
            ],
            out_specs=pl.BlockSpec((row_tile, H_out, W_pad), lambda i: (i, 0, 0)),
            compiler_params=pltpu.CompilerParams(
                dimension_semantics=("parallel",),
                vmem_limit_bytes=vmem_limit),
        )

    try:
        out_pad = jax.block_until_ready(_build_call(True)(x_rows, wy_d, wxt_d))
    except Exception:
        # Fallback for environments where single-buffering via
        # pipeline_mode=pl.Buffered(1) is unavailable; plain double-buffering.
        out_pad = _build_call(False)(x_rows, wy_d, wxt_d)

    # Layout plumbing in XLA (free): drop lane padding, restore NCHW.
    return out_pad[:, :, :W_out].reshape(B, C, H_out, W_out)
    # TODO(synk): under bf16 compute with H_in not a multiple of 16 (e.g. 200),
    # the in-kernel (TR, H_in, W_in)->(TR*H_in, W_in) merge becomes a relayout
    # copy; keep x f32 in HBM and cast after the merge in that configuration.


class BevFeatureSlicerPallas:
    """JAX/Pallas port of BevFeatureSlicer (inference forward pass)."""

    def __init__(self, grid_conf, map_grid_conf, *, compute_dtype=None):
        # compute_dtype=jnp.bfloat16 recommended on v6e/v7x (bf16-native MXU).
        self.compute_dtype = compute_dtype
        if grid_conf == map_grid_conf:
            self.identity_mapping = True
            self.map_grid = None
        else:
            self.identity_mapping = False
            _, bev_start, _ = _calculate_birds_eye_view_parameters(
                grid_conf['xbound'], grid_conf['ybound'], grid_conf['zbound'])
            map_res, map_start, _ = _calculate_birds_eye_view_parameters(
                map_grid_conf['xbound'], map_grid_conf['ybound'], map_grid_conf['zbound'])
            # NOTE: np.arange with a float step can, in edge cases, differ by
            # one endpoint element from torch.arange; sizes match for the
            # standard UniAD grid configs.
            map_x = np.arange(map_start[0], map_grid_conf['xbound'][1], map_res[0])
            map_y = np.arange(map_start[1], map_grid_conf['ybound'][1], map_res[1])
            self.norm_map_x = (map_x / -bev_start[0]).astype(np.float32)   # (W_out,)
            self.norm_map_y = (map_y / -bev_start[1]).astype(np.float32)   # (H_out,)
            # Full (H_out, W_out, 2) grid, identical to torch meshgrid + .T + stack
            gx, gy = np.meshgrid(self.norm_map_x, self.norm_map_y)          # 'xy'
            self.map_grid = np.stack([gx, gy], axis=2).astype(np.float32)

    def __call__(self, x):
        if self.identity_mapping:
            return x
        return _bev_slice_forward(x, self.norm_map_y, self.norm_map_x,
                                  compute_dtype=self.compute_dtype)


# ---------------------------------------------------------------------------
# Pure-JAX gather-based reference (validates the separable-matmul construction)
# ---------------------------------------------------------------------------
def _grid_sample_ref(x, grid):
    """Direct bilinear grid_sample, align_corners=True, padding_mode='zeros'."""
    B, C, H, W = x.shape
    gx = (grid[..., 0] + 1.0) * 0.5 * (W - 1)
    gy = (grid[..., 1] + 1.0) * 0.5 * (H - 1)
    x0 = jnp.floor(gx)
    y0 = jnp.floor(gy)
    x1, y1 = x0 + 1, y0 + 1
    wx1, wy1 = gx - x0, gy - y0
    wx0, wy0 = 1.0 - wx1, 1.0 - wy1

    def tap(yi, xi, w):
        valid = (yi >= 0) & (yi < H) & (xi >= 0) & (xi < W)
        yc = jnp.clip(yi, 0, H - 1).astype(jnp.int32)
        xc = jnp.clip(xi, 0, W - 1).astype(jnp.int32)
        vals = x[:, :, yc, xc]                               # (B, C, H_out, W_out)
        return vals * (w * valid.astype(x.dtype))

    return (tap(y0, x0, wy0 * wx0) + tap(y0, x1, wy0 * wx1)
            + tap(y1, x0, wy1 * wx0) + tap(y1, x1, wy1 * wx1))


if __name__ == "__main__":
    key = jax.random.PRNGKey(0)
    B, C, H_in, W_in = 2, 4, 16, 16

    # Source BEV grid: 16x16 cells of 1 m.  Target map grid: 32x32 cells of
    # 0.75 m over a larger extent — exercises fractional bilinear weights and
    # the zero-padding of out-of-range samples.
    grid_conf = dict(xbound=[-8.0, 8.0, 1.0], ybound=[-8.0, 8.0, 1.0],
                     zbound=[-10.0, 10.0, 20.0])
    map_grid_conf = dict(xbound=[-12.0, 12.0, 0.75], ybound=[-12.0, 12.0, 0.75],
                         zbound=[-10.0, 10.0, 20.0])

    x = jax.random.normal(key, (B, C, H_in, W_in), jnp.float32)

    # Identity branch (grid_conf == map_grid_conf) is a pass-through.
    assert BevFeatureSlicerPallas(grid_conf, grid_conf)(x) is x

    # f32 path (exact vs reference within MXU accumulation noise).
    slicer = BevFeatureSlicerPallas(grid_conf, map_grid_conf)
    out = jax.block_until_ready(slicer(x))

    H_out, W_out = slicer.map_grid.shape[:2]
    assert out.shape == (B, C, H_out, W_out), out.shape

    ref = _grid_sample_ref(x, jnp.asarray(slicer.map_grid))
    np.testing.assert_allclose(np.asarray(out), np.asarray(ref), rtol=5e-3, atol=5e-3)

    # bf16 MXU-operand path (recommended on v6e/v7x): same kernel, half the
    # DMA bytes, bf16-native MXU rate, f32 accumulation.  Looser tolerance.
    slicer_bf16 = BevFeatureSlicerPallas(grid_conf, map_grid_conf,
                                         compute_dtype=jnp.bfloat16)
    out_bf16 = jax.block_until_ready(slicer_bf16(x))
    assert out_bf16.shape == (B, C, H_out, W_out), out_bf16.shape
    np.testing.assert_allclose(np.asarray(out_bf16), np.asarray(ref),
                               rtol=6e-2, atol=6e-2)

    print("KERNEL_OK")
</pallas_src>

<mosaic_0001>
module attributes {stable_mosaic.version = 11 : i64} {
  func.func @_bev_slicer_kernel(%arg0: i32, %arg1: memref<8x16x16xf32, #tpu.memory_space<vmem>>, %arg2: memref<32x16xf32, #tpu.memory_space<vmem>>, %arg3: memref<16x128xf32, #tpu.memory_space<vmem>>, %arg4: memref<8x32x128xf32, #tpu.memory_space<vmem>>) attributes {dimension_semantics = [#tpu.dimension_semantics<parallel>], iteration_bounds = array<i64: 1>, scalar_prefetch = 0 : i64, scratch_operands = 0 : i64, tpu.core_type = #tpu.core_type<tc>, window_params = [{transform_indices = @transform_0, window_bounds = array<i64: 8, 16, 16>}, {pipeline_mode = #tpu.pipeline_mode<synchronous>, transform_indices = @transform_1, window_bounds = array<i64: 32, 16>}, {pipeline_mode = #tpu.pipeline_mode<synchronous>, transform_indices = @transform_2, window_bounds = array<i64: 16, 128>}, {transform_indices = @transform_3, window_bounds = array<i64: 8, 32, 128>}]} {
    %c0 = arith.constant 0 : index
    %c0_0 = arith.constant 0 : index
    %c0_1 = arith.constant 0 : index
    %0 = vector.load %arg1[%c0, %c0_0, %c0_1] : memref<8x16x16xf32, #tpu.memory_space<vmem>>, vector<8x16x16xf32>
    %1 = vector.shape_cast %0 : vector<8x16x16xf32> to vector<128x16xf32>
    %c0_2 = arith.constant 0 : index
    %c0_3 = arith.constant 0 : index
    %2 = vector.load %arg3[%c0_2, %c0_3] : memref<16x128xf32, #tpu.memory_space<vmem>>, vector<16x128xf32>
    %cst = arith.constant dense<0.000000e+00> : vector<128x128xf32>
    %3 = tpu.matmul %1, %2, %cst {dimension_numbers = #tpu.dot_dimension_numbers<[1], [0], [0], [1], [0, 0, 1, 1], [], []>} : vector<128x16xf32>, vector<16x128xf32>, vector<128x128xf32> -> vector<128x128xf32>
    %4 = vector.shape_cast %3 : vector<128x128xf32> to vector<8x16x128xf32>
    %c0_4 = arith.constant 0 : index
    %c0_5 = arith.constant 0 : index
    %5 = vector.load %arg2[%c0_4, %c0_5] : memref<32x16xf32, #tpu.memory_space<vmem>>, vector<32x16xf32>
    %6 = vector.shape_cast %5 : vector<32x16xf32> to vector<1x32x16xf32>
    %7 = vector.shape_cast %6 : vector<1x32x16xf32> to vector<1x32x16xf32>
    %8 = vector.broadcast %7 : vector<1x32x16xf32> to vector<8x32x16xf32>
    "tpu.trace_start"() <{level = 10 : i32, message = "roh,rhw->row"}> : () -> ()
    %cst_6 = arith.constant dense<0.000000e+00> : vector<8x32x128xf32>
    %9 = tpu.matmul %8, %4, %cst_6 {dimension_numbers = #tpu.dot_dimension_numbers<[2], [1], [1], [2], [0, 0, 0, 1, 1, 2], [0], [0]>} : vector<8x32x16xf32>, vector<8x16x128xf32>, vector<8x32x128xf32> -> vector<8x32x128xf32>
    "tpu.trace_stop"() : () -> ()
    %c0_7 = arith.constant 0 : index
    %c0_8 = arith.constant 0 : index
    %c0_9 = arith.constant 0 : index
    %10 = vector.load %arg4[%c0_7, %c0_8, %c0_9] : memref<8x32x128xf32, #tpu.memory_space<vmem>>, vector<8x32x128xf32>
    tpu.vector_store %arg4[%c0_7, %c0_8, %c0_9], %9 {strides = array<i32>} : memref<8x32x128xf32, #tpu.memory_space<vmem>>, vector<8x32x128xf32>,
    return
  }
  func.func @transform_0(%arg0: i32) -> (i32, i32, i32) {
    %c0_i32 = arith.constant 0 : i32
    %c0_i32_0 = arith.constant 0 : i32
    %c0_i32_1 = arith.constant 0 : i32
    return %arg0, %c0_i32, %c0_i32_0 : i32, i32, i32
  }
  func.func @transform_1(%arg0: i32) -> (i32, i32) {
    %c0_i32 = arith.constant 0 : i32
    %c0_i32_0 = arith.constant 0 : i32
    %c0_i32_1 = arith.constant 0 : i32
    return %c0_i32, %c0_i32_0 : i32, i32
  }
  func.func @transform_2(%arg0: i32) -> (i32, i32) {
    %c0_i32 = arith.constant 0 : i32
    %c0_i32_0 = arith.constant 0 : i32
    %c0_i32_1 = arith.constant 0 : i32
    return %c0_i32, %c0_i32_0 : i32, i32
  }
  func.func @transform_3(%arg0: i32) -> (i32, i32, i32) {
    %c0_i32 = arith.constant 0 : i32
    %c0_i32_0 = arith.constant 0 : i32
    %c0_i32_1 = arith.constant 0 : i32
    return %arg0, %c0_i32, %c0_i32_0 : i32, i32, i32
  }
}

module attributes {stable_mosaic.version = 11 : i64} {
  func.func @_bev_slicer_kernel(%arg0: i32, %arg1: memref<8x16x16xf32, #tpu.memory_space<vmem>>, %arg2: memref<32x16xf32, #tpu.memory_space<vmem>>, %arg3: memref<16x128xf32, #tpu.memory_space<vmem>>, %arg4: memref<8x32x128xf32, #tpu.memory_space<vmem>>) attributes {dimension_semantics = [#tpu.dimension_semantics<parallel>], iteration_bounds = array<i64: 1>, scalar_prefetch = 0 : i64, scratch_operands = 0 : i64, tpu.core_type = #tpu.core_type<tc>, window_params = [{transform_indices = @transform_0, window_bounds = array<i64: 8, 16, 16>}, {pipeline_mode = #tpu.pipeline_mode<synchronous>, transform_indices = @transform_1, window_bounds = array<i64: 32, 16>}, {pipeline_mode = #tpu.pipeline_mode<synchronous>, transform_indices = @transform_2, window_bounds = array<i64: 16, 128>}, {transform_indices = @transform_3, window_bounds = array<i64: 8, 32, 128>}]} {
    %c0 = arith.constant 0 : index
    %c0_0 = arith.constant 0 : index
    %c0_1 = arith.constant 0 : index
    %0 = vector.load %arg1[%c0, %c0_0, %c0_1] : memref<8x16x16xf32, #tpu.memory_space<vmem>>, vector<8x16x16xf32>
    %1 = vector.shape_cast %0 : vector<8x16x16xf32> to vector<128x16xf32>
    %c0_2 = arith.constant 0 : index
    %c0_3 = arith.constant 0 : index
    %2 = vector.load %arg3[%c0_2, %c0_3] : memref<16x128xf32, #tpu.memory_space<vmem>>, vector<16x128xf32>
    %cst = arith.constant dense<0.000000e+00> : vector<128x128xf32>
    %3 = tpu.matmul %1, %2, %cst {dimension_numbers = #tpu.dot_dimension_numbers<[1], [0], [0], [1], [0, 0, 1, 1], [], []>} : vector<128x16xf32>, vector<16x128xf32>, vector<128x128xf32> -> vector<128x128xf32>
    %4 = vector.shape_cast %3 : vector<128x128xf32> to vector<8x16x128xf32>
    %c0_4 = arith.constant 0 : index
    %c0_5 = arith.constant 0 : index
    %5 = vector.load %arg2[%c0_4, %c0_5] : memref<32x16xf32, #tpu.memory_space<vmem>>, vector<32x16xf32>
    %6 = vector.shape_cast %5 : vector<32x16xf32> to vector<1x32x16xf32>
    %7 = vector.shape_cast %6 : vector<1x32x16xf32> to vector<1x32x16xf32>
    %8 = vector.broadcast %7 : vector<1x32x16xf32> to vector<8x32x16xf32>
    "tpu.trace_start"() <{level = 10 : i32, message = "roh,rhw->row"}> : () -> ()
    %cst_6 = arith.constant dense<0.000000e+00> : vector<8x32x128xf32>
    %9 = tpu.matmul %8, %4, %cst_6 {dimension_numbers = #tpu.dot_dimension_numbers<[2], [1], [1], [2], [0, 0, 0, 1, 1, 2], [0], [0]>} : vector<8x32x16xf32>, vector<8x16x128xf32>, vector<8x32x128xf32> -> vector<8x32x128xf32>
    "tpu.trace_stop"() : () -> ()
    %c0_7 = arith.constant 0 : index
    %c0_8 = arith.constant 0 : index
    %c0_9 = arith.constant 0 : index
    %10 = vector.load %arg4[%c0_7, %c0_8, %c0_9] : memref<8x32x128xf32, #tpu.memory_space<vmem>>, vector<8x32x128xf32>
    tpu.vector_store %arg4[%c0_7, %c0_8, %c0_9], %9 {strides = array<i32>} : memref<8x32x128xf32, #tpu.memory_space<vmem>>, vector<8x32x128xf32>,
    return
  }
  func.func @transform_0(%arg0: i32) -> (i32, i32, i32) {
    %c0_i32 = arith.constant 0 : i32
    %c0_i32_0 = arith.constant 0 : i32
    %c0_i32_1 = arith.constant 0 : i32
    return %arg0, %c0_i32, %c0_i32_0 : i32, i32, i32
  }
  func.func @transform_1(%arg0: i32) -> (i32, i32) {
    %c0_i32 = arith.constant 0 : i32
    %c0_i32_0 = arith.constant 0 : i32
    %c0_i32_1 = arith.constant 0 : i32
    return %c0_i32, %c0_i32_0 : i32, i32
  }
  func.func @transform_2(%arg0: i32) -> (i32, i32) {
    %c0_i32 = arith.constant 0 : i32
    %c0_i32_0 = arith.constant 0 : i32
    %c0_i32_1 = arith.constant 0 : i32
    return %c0_i32, %c0_i32_0 : i32, i32
  }
  func.func @transform_3(%arg0: i32) -> (i32, i32, i32) {
    %c0_i32 = arith.constant 0 : i32
    %c0_i32_0 = arith.constant 0 : i32
    %c0_i32_1 = arith.constant 0 : i32
    return %arg0, %c0_i32, %c0_i32_0 : i32, i32, i32
  }
}

</mosaic_0001>

<llo_original>
// kernel: tpu_custom_call.1
$region0: #{tpu_custom_call.1}
  #allocation0 [shape = 'u32[]', space=smem, size = 0x4, offset = 0x4, fixed_abs, tag = 'smem constant byte address 0x4 - core index']
  #allocation1 [shape = 'u32[144,128]{1,0:T(1,128)}', space=vmem, size = 0x12000, scoped, tag = 'internal scratch']
  %s0 = inlined_call_operand.hbm [shape: f32[8,16,16], index: 0, kind: input, shape index: {}]
  %s1 = inlined_call_operand.vmem [shape: f32[32,16], index: 1, kind: input, shape index: {}]
  %s2 = inlined_call_operand.vmem [shape: f32[16,128], index: 2, kind: input, shape index: {}]
  %s3 = inlined_call_operand.hbm [shape: f32[8,32,128], index: 3, kind: output, shape index: {}]
  %s4 = sld [smem:[#allocation0]]
  $region26: #{tpu_custom_call.1} parent=0
    _
  %s6 = ssub.s32 1, %s4
  %s7 = scalar_select 0, %s6, %s4
  $region1: #{tpu_custom_call.1} parent=0
    #allocation2 [shape = 'u8[65536]{0}', space=vmem, size = 0x10000, scoped, tag = 'input window, operand 0, single buffered']
    #allocation3 [shape = 's32[1]{0}', space=sflag, size = 0x4, scoped, tag = 'scoped memory for tpu_custom_call.1']
    #allocation4 [shape = 's32[1]{0}', space=sflag, size = 0x4, scoped, tag = 'scoped memory for tpu_custom_call.1']
    #allocation5 [shape = 'u8[131072]{0}', space=vmem, size = 0x20000, scoped, tag = 'output window, operand 0, single buffered']
    %8 = vsyncpa [#allocation3], 0
    %9 = vsyncpa [#allocation4], 0
    // Predicated region
    $region2: #{tpu_custom_call.1} parent=1 // pred_check
      _
    $region3: #{tpu_custom_call.1} parent=1 // pred_check_branch
      %11 = sbr.rel (0) target = $region5
    $region4: #{tpu_custom_call.1} parent=1 // pred_region
      %s13 = ssub.s32 2048, 2048
      %14 = vsyncadd [#allocation3], %s13
      %s15 = sshll.u32 [#allocation2], 4
      %s16 = int_to_ptr.vmem [resolvable:$true] %s15
      %21 = dma.hbm_to_vmem [thread:$0]  %s0, 2048, %s16, [#allocation3], 128, 128, 8
    $region5: #{tpu_custom_call.1} parent=1 // pred_fallthru
      _
    // Predicated region
    $region6: #{tpu_custom_call.1} parent=1 // pred_check
      _
    $region7: #{tpu_custom_call.1} parent=1 // pred_check_branch
      %23 = sbr.rel (0) target = $region9
    $region8: #{tpu_custom_call.1} parent=1 // pred_region
      _
    $region9: #{tpu_custom_call.1} parent=1 // pred_fallthru
      _
    // Predicated region
    $region10: #{tpu_custom_call.1} parent=1 // pred_check
      _
    $region11: #{tpu_custom_call.1} parent=1 // pred_check_branch
      %25 = sbr.rel (0) target = $region13
    $region12: #{tpu_custom_call.1} parent=1 // pred_region
      _
    $region13: #{tpu_custom_call.1} parent=1 // pred_fallthru
      _
    // Predicated region
    $region14: #{tpu_custom_call.1} parent=1 // pred_check
      _
    $region15: #{tpu_custom_call.1} parent=1 // pred_check_branch
      %27 = sbr.rel (0) target = $region17
    $region16: #{tpu_custom_call.1} parent=1 // pred_region
      %28 = dma.done [#allocation3], 2048
    $region17: #{tpu_custom_call.1} parent=1 // pred_fallthru
      _
    %v29 = vld [vmem:[#allocation2] sm:$0xff]
    %v30 = vld [vmem:[#allocation2 + $0x8] sm:$0xff]
    %v31 = vld [vmem:[#allocation2 + $0x10] sm:$0xff]
    %v32 = vld [vmem:[#allocation2 + $0x18] sm:$0xff]
    %v33 = vld [vmem:[#allocation2 + $0x20] sm:$0xff]
    %v34 = vld [vmem:[#allocation2 + $0x28] sm:$0xff]
    %v35 = vld [vmem:[#allocation2 + $0x30] sm:$0xff]
    %v36 = vld [vmem:[#allocation2 + $0x38] sm:$0xff]
    %v37 = vld [vmem:[#allocation2 + $0x40] sm:$0xff]
    %v38 = vld [vmem:[#allocation2 + $0x48] sm:$0xff]
    %v39 = vld [vmem:[#allocation2 + $0x50] sm:$0xff]
    %v40 = vld [vmem:[#allocation2 + $0x58] sm:$0xff]
    %v41 = vld [vmem:[#allocation2 + $0x60] sm:$0xff]
    %v42 = vld [vmem:[#allocation2 + $0x68] sm:$0xff]
    %v43 = vld [vmem:[#allocation2 + $0x70] sm:$0xff]
    %v44 = vld [vmem:[#allocation2 + $0x78] sm:$0xff]
    %v45 = vld [vmem:[%s2] sm:$0xff]
    %v46 = vld [vmem:[%s2 + $0x8] sm:$0xff]
    %vm47 = vcmask 130048
    %v49 = vsel %vm47, %v29, 0
    %v52 = vsel %vm47, %v30, 0
    %v55 = vsel %vm47, %v31, 0
    %v58 = vsel %vm47, %v32, 0
    %v61 = vsel %vm47, %v33, 0
    %v64 = vsel %vm47, %v34, 0
    %v67 = vsel %vm47, %v35, 0
    %v70 = vsel %vm47, %v36, 0
    %v73 = vsel %vm47, %v37, 0
    %v76 = vsel %vm47, %v38, 0
    %v79 = vsel %vm47, %v39, 0
    %v82 = vsel %vm47, %v40, 0
    %v85 = vsel %vm47, %v41, 0
    %v88 = vsel %vm47, %v42, 0
    %v91 = vsel %vm47, %v43, 0
    %v94 = vsel %vm47, %v44, 0
    %96 = vmatprep.subr.mxu0 0.0
    %97 = vmatpush1.msra.mxu0 %v45
    %98 = vmatprep.subr.mxu0 0.0
    %99 = vmatpush1.msra.mxu0 %v46
    %100 = vmatprep.subr.mxu0 0.0
    %101 = vmatpush1.msra.mxu0 0.0
    %102 = vmatprep.subr.mxu0 0.0
    %103 = vmatpush1.msra.mxu0 0.0
    %104 = vmatprep.subr.mxu0 0.0
    %105 = vmatpush1.msra.mxu0 0.0
    %106 = vmatprep.subr.mxu0 0.0
    %107 = vmatpush1.msra.mxu0 0.0
    %108 = vmatprep.subr.mxu0 0.0
    %109 = vmatpush1.msra.mxu0 0.0
    %110 = vmatprep.subr.mxu0 0.0
    %111 = vmatpush1.msra.mxu0 0.0
    %112 = vmatprep.subr.mxu0 0.0
    %113 = vmatpush1.msra.mxu0 0.0
    %114 = vmatprep.subr.mxu0 0.0
    %115 = vmatpush1.msra.mxu0 0.0
    %116 = vmatprep.subr.mxu0 0.0
    %117 = vmatpush1.msra.mxu0 0.0
    %118 = vmatprep.subr.mxu0 0.0
    %119 = vmatpush1.msra.mxu0 0.0
    %120 = vmatprep.subr.mxu0 0.0
    %121 = vmatpush1.msra.mxu0 0.0
    %122 = vmatprep.subr.mxu0 0.0
    %123 = vmatpush1.msra.mxu0 0.0
    %124 = vmatprep.subr.mxu0 0.0
    %125 = vmatpush1.msra.mxu0 0.0
    %126 = vmatprep.subr.mxu0 0.0
    %127 = vmatpush1.msra.mxu0 0.0
    %128 = vmatprep.subr.mxu0 0.0
    %129 = vmatpush1.msra.mxu0 0.0
    %130 = vmatprep.subr.mxu0 0.0
    %131 = vmatpush1.msra.mxu0 0.0
    %132 = vmatprep.subr.mxu0 0.0
    %133 = vmatpush1.msra.mxu0 0.0
    %134 = vmatprep.subr.mxu0 0.0
    %135 = vmatpush1.msra.mxu0 0.0
    %136 = vmatprep.subr.mxu0 0.0
    %137 = vmatpush1.msra.mxu0 0.0
    %138 = vmatprep.subr.mxu0 0.0
    %139 = vmatpush1.msra.mxu0 0.0
    %140 = vmatprep.subr.mxu0 0.0
    %141 = vmatpush1.msra.mxu0 0.0
    %142 = vmatprep.subr.mxu0 0.0
    %143 = vmatpush1.msra.mxu0 0.0
    %144 = vmatprep.subr.mxu0 0.0
    %145 = vmatpush1.msra.mxu0 0.0
    %146 = vmatprep.subr.mxu0 0.0
    %147 = vmatpush1.msra.mxu0 0.0
    %148 = vmatprep.subr.mxu0 0.0
    %149 = vmatpush1.msra.mxu0 0.0
    %150 = vmatprep.subr.mxu0 0.0
    %151 = vmatpush1.msra.mxu0 0.0
    %152 = vmatprep.subr.mxu0 0.0
    %153 = vmatpush1.msra.mxu0 0.0
    %154 = vmatprep.subr.mxu0 0.0
    %155 = vmatpush1.msra.mxu0 0.0
    %156 = vmatprep.subr.mxu0 0.0
    %157 = vmatpush1.msra.mxu0 0.0
    %158 = vmatprep.subr.mxu0 0.0
    %159 = vmatpush1.msra.mxu0 0.0
    %160 = vmatprep.mubr.f32.mxu0 0.0
    %161 = vmatmul.mubr.f32.gmra.mrb[0].mxu0 %v49
    %v162 = vpop.f32.mrb[0].mxu0
    %v163 = vadd.f32 0.0, %v162
    %v164 = vpop.f32.mrb[0].mxu0
    %165 = vmatprep.mubr.f32.mxu0 0.0
    %166 = vmatmul.mubr.f32.gmra.mrb[0].mxu0 %v52
    %v167 = vpop.f32.mrb[0].mxu0
    %v168 = vadd.f32 0.0, %v167
    %v169 = vpop.f32.mrb[0].mxu0
    %170 = vmatprep.mubr.f32.mxu0 0.0
    %171 = vmatmul.mubr.f32.gmra.mrb[0].mxu0 %v55
    %v172 = vpop.f32.mrb[0].mxu0
    %v173 = vadd.f32 0.0, %v172
    %v174 = vpop.f32.mrb[0].mxu0
    %175 = vmatprep.mubr.f32.mxu0 0.0
    %176 = vmatmul.mubr.f32.gmra.mrb[0].mxu0 %v58
    %v177 = vpop.f32.mrb[0].mxu0
    %v178 = vadd.f32 0.0, %v177
    %v179 = vpop.f32.mrb[0].mxu0
    %180 = vmatprep.mubr.f32.mxu0 0.0
    %181 = vmatmul.mubr.f32.gmra.mrb[0].mxu0 %v61
    %v182 = vpop.f32.mrb[0].mxu0
    %v183 = vadd.f32 0.0, %v182
    %v184 = vpop.f32.mrb[0].mxu0
    %185 = vmatprep.mubr.f32.mxu0 0.0
    %186 = vmatmul.mubr.f32.gmra.mrb[0].mxu0 %v64
    %v187 = vpop.f32.mrb[0].mxu0
    %v188 = vadd.f32 0.0, %v187
    %v189 = vpop.f32.mrb[0].mxu0
    %190 = vmatprep.mubr.f32.mxu0 0.0
    %191 = vmatmul.mubr.f32.gmra.mrb[0].mxu0 %v67
    %v192 = vpop.f32.mrb[0].mxu0
    %v193 = vadd.f32 0.0, %v192
    %v194 = vpop.f32.mrb[0].mxu0
    %195 = vmatprep.mubr.f32.mxu0 0.0
    %196 = vmatmul.mubr.f32.gmra.mrb[0].mxu0 %v70
    %v197 = vpop.f32.mrb[0].mxu0
    %v198 = vadd.f32 0.0, %v197
    %v199 = vpop.f32.mrb[0].mxu0
    %200 = vmatprep.mubr.f32.mxu0 0.0
    %201 = vmatmul.mubr.f32.gmra.mrb[0].mxu0 %v73
    %v202 = vpop.f32.mrb[0].mxu0
    %v203 = vadd.f32 0.0, %v202
    %v204 = vpop.f32.mrb[0].mxu0
    %205 = vmatprep.mubr.f32.mxu0 0.0
    %206 = vmatmul.mubr.f32.gmra.mrb[0].mxu0 %v76
    %v207 = vpop.f32.mrb[0].mxu0
    %v208 = vadd.f32 0.0, %v207
    %v209 = vpop.f32.mrb[0].mxu0
    %210 = vmatprep.mubr.f32.mxu0 0.0
    %211 = vmatmul.mubr.f32.gmra.mrb[0].mxu0 %v79
    %v212 = vpop.f32.mrb[0].mxu0
    %v213 = vadd.f32 0.0, %v212
    %v214 = vpop.f32.mrb[0].mxu0
    %215 = vmatprep.mubr.f32.mxu0 0.0
    %216 = vmatmul.mubr.f32.gmra.mrb[0].mxu0 %v82
    %v217 = vpop.f32.mrb[0].mxu0
    %v218 = vadd.f32 0.0, %v217
    %v219 = vpop.f32.mrb[0].mxu0
    %220 = vmatprep.mubr.f32.mxu0 0.0
    %221 = vmatmul.mubr.f32.gmra.mrb[0].mxu0 %v85
    %v222 = vpop.f32.mrb[0].mxu0
    %v223 = vadd.f32 0.0, %v222
    %v224 = vpop.f32.mrb[0].mxu0
    %225 = vmatprep.mubr.f32.mxu0 0.0
    %226 = vmatmul.mubr.f32.gmra.mrb[0].mxu0 %v88
    %v227 = vpop.f32.mrb[0].mxu0
    %v228 = vadd.f32 0.0, %v227
    %v229 = vpop.f32.mrb[0].mxu0
    %230 = vmatprep.mubr.f32.mxu0 0.0
    %231 = vmatmul.mubr.f32.gmra.mrb[0].mxu0 %v91
    %v232 = vpop.f32.mrb[0].mxu0
    %v233 = vadd.f32 0.0, %v232
    %v234 = vpop.f32.mrb[0].mxu0
    %235 = vmatprep.mubr.f32.mxu0 0.0
    %236 = vmatmul.mubr.f32.gmra.mrb[0].mxu0 %v94
    %v237 = vpop.f32.mrb[0].mxu0
    %v238 = vadd.f32 0.0, %v237
    %v239 = vpop.f32.mrb[0].mxu0
    %240 = vdwg.mxu0
    %v241 = vld [vmem:[%s1] sm:$0xff]
    %v242 = vld [vmem:[%s1 + $0x8] sm:$0xff]
    %v243 = vld [vmem:[%s1 + $0x10] sm:$0xff]
    %v244 = vld [vmem:[%s1 + $0x18] sm:$0xff]
    %v246 = vsel %vm47, %v241, 0
    %v249 = vsel %vm47, %v242, 0
    %v252 = vsel %vm47, %v243, 0
    %v255 = vsel %vm47, %v244, 0
    %257 = vmatprep.subr.mxu0 0.0
    %258 = vmatpush1.msra.mxu0 %v163
    %259 = vmatprep.subr.mxu0 0.0
    %260 = vmatpush1.msra.mxu0 %v168
    %261 = vmatprep.subr.mxu0 0.0
    %262 = vmatpush1.msra.mxu0 0.0
    %263 = vmatprep.subr.mxu0 0.0
    %264 = vmatpush1.msra.mxu0 0.0
    %265 = vmatprep.subr.mxu0 0.0
    %266 = vmatpush1.msra.mxu0 0.0
    %267 = vmatprep.subr.mxu0 0.0
    %268 = vmatpush1.msra.mxu0 0.0
    %269 = vmatprep.subr.mxu0 0.0
    %270 = vmatpush1.msra.mxu0 0.0
    %271 = vmatprep.subr.mxu0 0.0
    %272 = vmatpush1.msra.mxu0 0.0
    %273 = vmatprep.subr.mxu0 0.0
    %274 = vmatpush1.msra.mxu0 0.0
    %275 = vmatprep.subr.mxu0 0.0
    %276 = vmatpush1.msra.mxu0 0.0
    %277 = vmatprep.subr.mxu0 0.0
    %278 = vmatpush1.msra.mxu0 0.0
    %279 = vmatprep.subr.mxu0 0.0
    %280 = vmatpush1.msra.mxu0 0.0
    %281 = vmatprep.subr.mxu0 0.0
    %282 = vmatpush1.msra.mxu0 0.0
    %283 = vmatprep.subr.mxu0 0.0
    %284 = vmatpush1.msra.mxu0 0.0
    %285 = vmatprep.subr.mxu0 0.0
    %286 = vmatpush1.msra.mxu0 0.0
    %287 = vmatprep.subr.mxu0 0.0
    %288 = vmatpush1.msra.mxu0 0.0
    %289 = vmatprep.subr.mxu0 0.0
    %290 = vmatpush1.msra.mxu0 0.0
    %291 = vmatprep.subr.mxu0 0.0
    %292 = vmatpush1.msra.mxu0 0.0
    %293 = vmatprep.subr.mxu0 0.0
    %294 = vmatpush1.msra.mxu0 0.0
    %295 = vmatprep.subr.mxu0 0.0
    %296 = vmatpush1.msra.mxu0 0.0
    %297 = vmatprep.subr.mxu0 0.0
    %298 = vmatpush1.msra.mxu0 0.0
    %299 = vmatprep.subr.mxu0 0.0
    %300 = vmatpush1.msra.mxu0 0.0
    %301 = vmatprep.subr.mxu0 0.0
    %302 = vmatpush1.msra.mxu0 0.0
    %303 = vmatprep.subr.mxu0 0.0
    %304 = vmatpush1.msra.mxu0 0.0
    %305 = vmatprep.subr.mxu0 0.0
    %306 = vmatpush1.msra.mxu0 0.0
    %307 = vmatprep.subr.mxu0 0.0
    %308 = vmatpush1.msra.mxu0 0.0
    %309 = vmatprep.subr.mxu0 0.0
    %310 = vmatpush1.msra.mxu0 0.0
    %311 = vmatprep.subr.mxu0 0.0
    %312 = vmatpush1.msra.mxu0 0.0
    %313 = vmatprep.subr.mxu0 0.0
    %314 = vmatpush1.msra.mxu0 0.0
    %315 = vmatprep.subr.mxu0 0.0
    %316 = vmatpush1.msra.mxu0 0.0
    %317 = vmatprep.subr.mxu0 0.0
    %318 = vmatpush1.msra.mxu0 0.0
    %319 = vmatprep.subr.mxu0 0.0
    %320 = vmatpush1.msra.mxu0 0.0
    %321 = vmatprep.mubr.f32.mxu0 0.0
    %322 = vmatmul.mubr.f32.gmra.mrb[0].mxu0 %v246
    %v323 = vpop.f32.mrb[0].mxu0
    %v324 = vadd.f32 0.0, %v323
    %v325 = vpop.f32.mrb[0].mxu0
    %326 = vmatprep.mubr.f32.mxu0 0.0
    %327 = vmatmul.mubr.f32.gmra.mrb[0].mxu0 %v249
    %v328 = vpop.f32.mrb[0].mxu0
    %v329 = vadd.f32 0.0, %v328
    %v330 = vpop.f32.mrb[0].mxu0
    %331 = vmatprep.mubr.f32.mxu0 0.0
    %332 = vmatmul.mubr.f32.gmra.mrb[0].mxu0 %v252
    %v333 = vpop.f32.mrb[0].mxu0
    %v334 = vadd.f32 0.0, %v333
    %v335 = vpop.f32.mrb[0].mxu0
    %336 = vmatprep.mubr.f32.mxu0 0.0
    %337 = vmatmul.mubr.f32.gmra.mrb[0].mxu0 %v255
    %v338 = vpop.f32.mrb[0].mxu0
    %v339 = vadd.f32 0.0, %v338
    %v340 = vpop.f32.mrb[0].mxu0
    %341 = vdwg.mxu0
    %342 = vmatprep.subr.mxu0 0.0
    %343 = vmatpush1.msra.mxu0 %v173
    %344 = vmatprep.subr.mxu0 0.0
    %345 = vmatpush1.msra.mxu0 %v178
    %346 = vmatprep.subr.mxu0 0.0
    %347 = vmatpush1.msra.mxu0 0.0
    %348 = vmatprep.subr.mxu0 0.0
    %349 = vmatpush1.msra.mxu0 0.0
    %350 = vmatprep.subr.mxu0 0.0
    %351 = vmatpush1.msra.mxu0 0.0
    %352 = vmatprep.subr.mxu0 0.0
    %353 = vmatpush1.msra.mxu0 0.0
    %354 = vmatprep.subr.mxu0 0.0
    %355 = vmatpush1.msra.mxu0 0.0
    %356 = vmatprep.subr.mxu0 0.0
    %357 = vmatpush1.msra.mxu0 0.0
    %358 = vmatprep.subr.mxu0 0.0
    %359 = vmatpush1.msra.mxu0 0.0
    %360 = vmatprep.subr.mxu0 0.0
    %361 = vmatpush1.msra.mxu0 0.0
    %362 = vmatprep.subr.mxu0 0.0
    %363 = vmatpush1.msra.mxu0 0.0
    %364 = vmatprep.subr.mxu0 0.0
    %365 = vmatpush1.msra.mxu0 0.0
    %366 = vmatprep.subr.mxu0 0.0
    %367 = vmatpush1.msra.mxu0 0.0
    %368 = vmatprep.subr.mxu0 0.0
    %369 = vmatpush1.msra.mxu0 0.0
    %370 = vmatprep.subr.mxu0 0.0
    %371 = vmatpush1.msra.mxu0 0.0
    %372 = vmatprep.subr.mxu0 0.0
    %373 = vmatpush1.msra.mxu0 0.0
    %374 = vmatprep.subr.mxu0 0.0
    %375 = vmatpush1.msra.mxu0 0.0
    %376 = vmatprep.subr.mxu0 0.0
    %377 = vmatpush1.msra.mxu0 0.0
    %378 = vmatprep.subr.mxu0 0.0
    %379 = vmatpush1.msra.mxu0 0.0
    %380 = vmatprep.subr.mxu0 0.0
    %381 = vmatpush1.msra.mxu0 0.0
    %382 = vmatprep.subr.mxu0 0.0
    %383 = vmatpush1.msra.mxu0 0.0
    %384 = vmatprep.subr.mxu0 0.0
    %385 = vmatpush1.msra.mxu0 0.0
    %386 = vmatprep.subr.mxu0 0.0
    %387 = vmatpush1.msra.mxu0 0.0
    %388 = vmatprep.subr.mxu0 0.0
    %389 = vmatpush1.msra.mxu0 0.0
    %390 = vmatprep.subr.mxu0 0.0
    %391 = vmatpush1.msra.mxu0 0.0
    %392 = vmatprep.subr.mxu0 0.0
    %393 = vmatpush1.msra.mxu0 0.0
    %394 = vmatprep.subr.mxu0 0.0
    %395 = vmatpush1.msra.mxu0 0.0
    %396 = vmatprep.subr.mxu0 0.0
    %397 = vmatpush1.msra.mxu0 0.0
    %398 = vmatprep.subr.mxu0 0.0
    %399 = vmatpush1.msra.mxu0 0.0
    %400 = vmatprep.subr.mxu0 0.0
    %401 = vmatpush1.msra.mxu0 0.0
    %402 = vmatprep.subr.mxu0 0.0
    %403 = vmatpush1.msra.mxu0 0.0
    %404 = vmatprep.subr.mxu0 0.0
    %405 = vmatpush1.msra.mxu0 0.0
    %406 = vmatprep.mubr.f32.mxu0 0.0
    %407 = vmatmul.mubr.f32.gmra.mrb[0].mxu0 %v246
    %v408 = vpop.f32.mrb[0].mxu0
    %v409 = vadd.f32 0.0, %v408
    %v410 = vpop.f32.mrb[0].mxu0
    %411 = vmatprep.mubr.f32.mxu0 0.0
    %412 = vmatmul.mubr.f32.gmra.mrb[0].mxu0 %v249
    %v413 = vpop.f32.mrb[0].mxu0
    %v414 = vadd.f32 0.0, %v413
    %v415 = vpop.f32.mrb[0].mxu0
    %416 = vmatprep.mubr.f32.mxu0 0.0
    %417 = vmatmul.mubr.f32.gmra.mrb[0].mxu0 %v252
    %v418 = vpop.f32.mrb[0].mxu0
    %v419 = vadd.f32 0.0, %v418
    %v420 = vpop.f32.mrb[0].mxu0
    %421 = vmatprep.mubr.f32.mxu0 0.0
    %422 = vmatmul.mubr.f32.gmra.mrb[0].mxu0 %v255
    %v423 = vpop.f32.mrb[0].mxu0
    %v424 = vadd.f32 0.0, %v423
    %v425 = vpop.f32.mrb[0].mxu0
    %426 = vdwg.mxu0
    %427 = vmatprep.subr.mxu0 0.0
    %428 = vmatpush1.msra.mxu0 %v183
    %429 = vmatprep.subr.mxu0 0.0
    %430 = vmatpush1.msra.mxu0 %v188
    %431 = vmatprep.subr.mxu0 0.0
    %432 = vmatpush1.msra.mxu0 0.0
    %433 = vmatprep.subr.mxu0 0.0
    %434 = vmatpush1.msra.mxu0 0.0
    %435 = vmatprep.subr.mxu0 0.0
    %436 = vmatpush1.msra.mxu0 0.0
    %437 = vmatprep.subr.mxu0 0.0
    %438 = vmatpush1.msra.mxu0 0.0
    %439 = vmatprep.subr.mxu0 0.0
    %440 = vmatpush1.msra.mxu0 0.0
    %441 = vmatprep.subr.mxu0 0.0
    %442 = vmatpush1.msra.mxu0 0.0
    %443 = vmatprep.subr.mxu0 0.0
    %444 = vmatpush1.msra.mxu0 0.0
    %445 = vmatprep.subr.mxu0 0.0
    %446 = vmatpush1.msra.mxu0 0.0
    %447 = vmatprep.subr.mxu0 0.0
    %448 = vmatpush1.msra.mxu0 0.0
    %449 = vmatprep.subr.mxu0 0.0
    %450 = vmatpush1.msra.mxu0 0.0
    %451 = vmatprep.subr.mxu0 0.0
    %452 = vmatpush1.msra.mxu0 0.0
    %453 = vmatprep.subr.mxu0 0.0
    %454 = vmatpush1.msra.mxu0 0.0
    %455 = vmatprep.subr.mxu0 0.0
    %456 = vmatpush1.msra.mxu0 0.0
    %457 = vmatprep.subr.mxu0 0.0
    %458 = vmatpush1.msra.mxu0 0.0
    %459 = vmatprep.subr.mxu0 0.0
    %460 = vmatpush1.msra.mxu0 0.0
    %461 = vmatprep.subr.mxu0 0.0
    %462 = vmatpush1.msra.mxu0 0.0
    %463 = vmatprep.subr.mxu0 0.0
    %464 = vmatpush1.msra.mxu0 0.0
    %465 = vmatprep.subr.mxu0 0.0
    %466 = vmatpush1.msra.mxu0 0.0
    %467 = vmatprep.subr.mxu0 0.0
    %468 = vmatpush1.msra.mxu0 0.0
    %469 = vmatprep.subr.mxu0 0.0
    %470 = vmatpush1.msra.mxu0 0.0
    %471 = vmatprep.subr.mxu0 0.0
    %472 = vmatpush1.msra.mxu0 0.0
    %473 = vmatprep.subr.mxu0 0.0
    %474 = vmatpush1.msra.mxu0 0.0
    %475 = vmatprep.subr.mxu0 0.0
    %476 = vmatpush1.msra.mxu0 0.0
    %477 = vmatprep.subr.mxu0 0.0
    %478 = vmatpush1.msra.mxu0 0.0
    %479 = vmatprep.subr.mxu0 0.0
    %480 = vmatpush1.msra.mxu0 0.0
    %481 = vmatprep.subr.mxu0 0.0
    %482 = vmatpush1.msra.mxu0 0.0
    %483 = vmatprep.subr.mxu0 0.0
    %484 = vmatpush1.msra.mxu0 0.0
    %485 = vmatprep.subr.mxu0 0.0
    %486 = vmatpush1.msra.mxu0 0.0
    %487 = vmatprep.subr.mxu0 0.0
    %488 = vmatpush1.msra.mxu0 0.0
    %489 = vmatprep.subr.mxu0 0.0
    %490 = vmatpush1.msra.mxu0 0.0
    %491 = vmatprep.mubr.f32.mxu0 0.0
    %492 = vmatmul.mubr.f32.gmra.mrb[0].mxu0 %v246
    %v493 = vpop.f32.mrb[0].mxu0
    %v494 = vadd.f32 0.0, %v493
    %v495 = vpop.f32.mrb[0].mxu0
    %496 = vmatprep.mubr.f32.mxu0 0.0
    %497 = vmatmul.mubr.f32.gmra.mrb[0].mxu0 %v249
    %v498 = vpop.f32.mrb[0].mxu0
    %v499 = vadd.f32 0.0, %v498
    %v500 = vpop.f32.mrb[0].mxu0
    %501 = vmatprep.mubr.f32.mxu0 0.0
    %502 = vmatmul.mubr.f32.gmra.mrb[0].mxu0 %v252
    %v503 = vpop.f32.mrb[0].mxu0
    %v504 = vadd.f32 0.0, %v503
    %v505 = vpop.f32.mrb[0].mxu0
    %506 = vmatprep.mubr.f32.mxu0 0.0
    %507 = vmatmul.mubr.f32.gmra.mrb[0].mxu0 %v255
    %v508 = vpop.f32.mrb[0].mxu0
    %v509 = vadd.f32 0.0, %v508
    %v510 = vpop.f32.mrb[0].mxu0
    %511 = vdwg.mxu0
    %512 = vmatprep.subr.mxu0 0.0
    %513 = vmatpush1.msra.mxu0 %v193
    %514 = vmatprep.subr.mxu0 0.0
    %515 = vmatpush1.msra.mxu0 %v198
    %516 = vmatprep.subr.mxu0 0.0
    %517 = vmatpush1.msra.mxu0 0.0
    %518 = vmatprep.subr.mxu0 0.0
    %519 = vmatpush1.msra.mxu0 0.0
    %520 = vmatprep.subr.mxu0 0.0
    %521 = vmatpush1.msra.mxu0 0.0
    %522 = vmatprep.subr.mxu0 0.0
    %523 = vmatpush1.msra.mxu0 0.0
    %524 = vmatprep.subr.mxu0 0.0
    %525 = vmatpush1.msra.mxu0 0.0
    %526 = vmatprep.subr.mxu0 0.0
    %527 = vmatpush1.msra.mxu0 0.0
    %528 = vmatprep.subr.mxu0 0.0
    %529 = vmatpush1.msra.mxu0 0.0
    %530 = vmatprep.subr.mxu0 0.0
    %531 = vmatpush1.msra.mxu0 0.0
    %532 = vmatprep.subr.mxu0 0.0
    %533 = vmatpush1.msra.mxu0 0.0
    %534 = vmatprep.subr.mxu0 0.0
    %535 = vmatpush1.msra.mxu0 0.0
    %536 = vmatprep.subr.mxu0 0.0
    %537 = vmatpush1.msra.mxu0 0.0
    %538 = vmatprep.subr.mxu0 0.0
    %539 = vmatpush1.msra.mxu0 0.0
    %540 = vmatprep.subr.mxu0 0.0
    %541 = vmatpush1.msra.mxu0 0.0
    %542 = vmatprep.subr.mxu0 0.0
    %543 = vmatpush1.msra.mxu0 0.0
    %544 = vmatprep.subr.mxu0 0.0
    %545 = vmatpush1.msra.mxu0 0.0
    %546 = vmatprep.subr.mxu0 0.0
    %547 = vmatpush1.msra.mxu0 0.0
    %548 = vmatprep.subr.mxu0 0.0
    %549 = vmatpush1.msra.mxu0 0.0
    %550 = vmatprep.subr.mxu0 0.0
    %551 = vmatpush1.msra.mxu0 0.0
    %552 = vmatprep.subr.mxu0 0.0
    %553 = vmatpush1.msra.mxu0 0.0
    %554 = vmatprep.subr.mxu0 0.0
    %555 = vmatpush1.msra.mxu0 0.0
    %556 = vmatprep.subr.mxu0 0.0
    %557 = vmatpush1.msra.mxu0 0.0
    %558 = vmatprep.subr.mxu0 0.0
    %559 = vmatpush1.msra.mxu0 0.0
    %560 = vmatprep.subr.mxu0 0.0
    %561 = vmatpush1.msra.mxu0 0.0
    %562 = vmatprep.subr.mxu0 0.0
    %563 = vmatpush1.msra.mxu0 0.0
    %564 = vmatprep.subr.mxu0 0.0
    %565 = vmatpush1.msra.mxu0 0.0
    %566 = vmatprep.subr.mxu0 0.0
    %567 = vmatpush1.msra.mxu0 0.0
    %568 = vmatprep.subr.mxu0 0.0
    %569 = vmatpush1.msra.mxu0 0.0
    %570 = vmatprep.subr.mxu0 0.0
    %571 = vmatpush1.msra.mxu0 0.0
    %572 = vmatprep.subr.mxu0 0.0
    %573 = vmatpush1.msra.mxu0 0.0
    %574 = vmatprep.subr.mxu0 0.0
    %575 = vmatpush1.msra.mxu0 0.0
    %576 = vmatprep.mubr.f32.mxu0 0.0
    %577 = vmatmul.mubr.f32.gmra.mrb[0].mxu0 %v246
    %v578 = vpop.f32.mrb[0].mxu0
    %v579 = vadd.f32 0.0, %v578
    %v580 = vpop.f32.mrb[0].mxu0
    %581 = vmatprep.mubr.f32.mxu0 0.0
    %582 = vmatmul.mubr.f32.gmra.mrb[0].mxu0 %v249
    %v583 = vpop.f32.mrb[0].mxu0
    %v584 = vadd.f32 0.0, %v583
    %v585 = vpop.f32.mrb[0].mxu0
    %586 = vmatprep.mubr.f32.mxu0 0.0
    %587 = vmatmul.mubr.f32.gmra.mrb[0].mxu0 %v252
    %v588 = vpop.f32.mrb[0].mxu0
    %v589 = vadd.f32 0.0, %v588
    %v590 = vpop.f32.mrb[0].mxu0
    %591 = vmatprep.mubr.f32.mxu0 0.0
    %592 = vmatmul.mubr.f32.gmra.mrb[0].mxu0 %v255
    %v593 = vpop.f32.mrb[0].mxu0
    %v594 = vadd.f32 0.0, %v593
    %v595 = vpop.f32.mrb[0].mxu0
    %596 = vdwg.mxu0
    %597 = vmatprep.subr.mxu0 0.0
    %598 = vmatpush1.msra.mxu0 %v203
    %599 = vmatprep.subr.mxu0 0.0
    %600 = vmatpush1.msra.mxu0 %v208
    %601 = vmatprep.subr.mxu0 0.0
    %602 = vmatpush1.msra.mxu0 0.0
    %603 = vmatprep.subr.mxu0 0.0
    %604 = vmatpush1.msra.mxu0 0.0
    %605 = vmatprep.subr.mxu0 0.0
    %606 = vmatpush1.msra.mxu0 0.0
    %607 = vmatprep.subr.mxu0 0.0
    %608 = vmatpush1.msra.mxu0 0.0
    %609 = vmatprep.subr.mxu0 0.0
    %610 = vmatpush1.msra.mxu0 0.0
    %611 = vmatprep.subr.mxu0 0.0
    %612 = vmatpush1.msra.mxu0 0.0
    %613 = vmatprep.subr.mxu0 0.0
    %614 = vmatpush1.msra.mxu0 0.0
    %615 = vmatprep.subr.mxu0 0.0
    %616 = vmatpush1.msra.mxu0 0.0
    %617 = vmatprep.subr.mxu0 0.0
    %618 = vmatpush1.msra.mxu0 0.0
    %619 = vmatprep.subr.mxu0 0.0
    %620 = vmatpush1.msra.mxu0 0.0
    %621 = vmatprep.subr.mxu0 0.0
    %622 = vmatpush1.msra.mxu0 0.0
    %623 = vmatprep.subr.mxu0 0.0
    %624 = vmatpush1.msra.mxu0 0.0
    %625 = vmatprep.subr.mxu0 0.0
    %626 = vmatpush1.msra.mxu0 0.0
    %627 = vmatprep.subr.mxu0 0.0
    %628 = vmatpush1.msra.mxu0 0.0
    %629 = vmatprep.subr.mxu0 0.0
    %630 = vmatpush1.msra.mxu0 0.0
    %631 = vmatprep.subr.mxu0 0.0
    %632 = vmatpush1.msra.mxu0 0.0
    %633 = vmatprep.subr.mxu0 0.0
    %634 = vmatpush1.msra.mxu0 0.0
    %635 = vmatprep.subr.mxu0 0.0
    %636 = vmatpush1.msra.mxu0 0.0
    %637 = vmatprep.subr.mxu0 0.0
    %638 = vmatpush1.msra.mxu0 0.0
    %639 = vmatprep.subr.mxu0 0.0
    %640 = vmatpush1.msra.mxu0 0.0
    %641 = vmatprep.subr.mxu0 0.0
    %642 = vmatpush1.msra.mxu0 0.0
    %643 = vmatprep.subr.mxu0 0.0
    %644 = vmatpush1.msra.mxu0 0.0
    %645 = vmatprep.subr.mxu0 0.0
    %646 = vmatpush1.msra.mxu0 0.0
    %647 = vmatprep.subr.mxu0 0.0
    %648 = vmatpush1.msra.mxu0 0.0
    %649 = vmatprep.subr.mxu0 0.0
    %650 = vmatpush1.msra.mxu0 0.0
    %651 = vmatprep.subr.mxu0 0.0
    %652 = vmatpush1.msra.mxu0 0.0
    %653 = vmatprep.subr.mxu0 0.0
    %654 = vmatpush1.msra.mxu0 0.0
    %655 = vmatprep.subr.mxu0 0.0
    %656 = vmatpush1.msra.mxu0 0.0
    %657 = vmatprep.subr.mxu0 0.0
    %658 = vmatpush1.msra.mxu0 0.0
    %659 = vmatprep.subr.mxu0 0.0
    %660 = vmatpush1.msra.mxu0 0.0
    %661 = vmatprep.mubr.f32.mxu0 0.0
    %662 = vmatmul.mubr.f32.gmra.mrb[0].mxu0 %v246
    %v663 = vpop.f32.mrb[0].mxu0
    %v664 = vadd.f32 0.0, %v663
    %v665 = vpop.f32.mrb[0].mxu0
    %666 = vmatprep.mubr.f32.mxu0 0.0
    %667 = vmatmul.mubr.f32.gmra.mrb[0].mxu0 %v249
    %v668 = vpop.f32.mrb[0].mxu0
    %v669 = vadd.f32 0.0, %v668
    %v670 = vpop.f32.mrb[0].mxu0
    %671 = vmatprep.mubr.f32.mxu0 0.0
    %672 = vmatmul.mubr.f32.gmra.mrb[0].mxu0 %v252
    %v673 = vpop.f32.mrb[0].mxu0
    %v674 = vadd.f32 0.0, %v673
    %v675 = vpop.f32.mrb[0].mxu0
    %676 = vmatprep.mubr.f32.mxu0 0.0
    %677 = vmatmul.mubr.f32.gmra.mrb[0].mxu0 %v255
    %v678 = vpop.f32.mrb[0].mxu0
    %v679 = vadd.f32 0.0, %v678
    %v680 = vpop.f32.mrb[0].mxu0
    %681 = vdwg.mxu0
    %682 = vmatprep.subr.mxu0 0.0
    %683 = vmatpush1.msra.mxu0 %v213
    %684 = vmatprep.subr.mxu0 0.0
    %685 = vmatpush1.msra.mxu0 %v218
    %686 = vmatprep.subr.mxu0 0.0
    %687 = vmatpush1.msra.mxu0 0.0
    %688 = vmatprep.subr.mxu0 0.0
    %689 = vmatpush1.msra.mxu0 0.0
    %690 = vmatprep.subr.mxu0 0.0
    %691 = vmatpush1.msra.mxu0 0.0
    %692 = vmatprep.subr.mxu0 0.0
    %693 = vmatpush1.msra.mxu0 0.0
    %694 = vmatprep.subr.mxu0 0.0
    %695 = vmatpush1.msra.mxu0 0.0
    %696 = vmatprep.subr.mxu0 0.0
    %697 = vmatpush1.msra.mxu0 0.0
    %698 = vmatprep.subr.mxu0 0.0
    %699 = vmatpush1.msra.mxu0 0.0
    %700 = vmatprep.subr.mxu0 0.0
    %701 = vmatpush1.msra.mxu0 0.0
    %702 = vmatprep.subr.mxu0 0.0
    %703 = vmatpush1.msra.mxu0 0.0
    %704 = vmatprep.subr.mxu0 0.0
    %705 = vmatpush1.msra.mxu0 0.0
    %706 = vmatprep.subr.mxu0 0.0
    %707 = vmatpush1.msra.mxu0 0.0
    %708 = vmatprep.subr.mxu0 0.0
    %709 = vmatpush1.msra.mxu0 0.0
    %710 = vmatprep.subr.mxu0 0.0
    %711 = vmatpush1.msra.mxu0 0.0
    %712 = vmatprep.subr.mxu0 0.0
    %713 = vmatpush1.msra.mxu0 0.0
    %714 = vmatprep.subr.mxu0 0.0
    %715 = vmatpush1.msra.mxu0 0.0
    %716 = vmatprep.subr.mxu0 0.0
    %717 = vmatpush1.msra.mxu0 0.0
    %718 = vmatprep.subr.mxu0 0.0
    %719 = vmatpush1.msra.mxu0 0.0
    %720 = vmatprep.subr.mxu0 0.0
    %721 = vmatpush1.msra.mxu0 0.0
    %722 = vmatprep.subr.mxu0 0.0
    %723 = vmatpush1.msra.mxu0 0.0
    %724 = vmatprep.subr.mxu0 0.0
    %725 = vmatpush1.msra.mxu0 0.0
    %726 = vmatprep.subr.mxu0 0.0
    %727 = vmatpush1.msra.mxu0 0.0
    %728 = vmatprep.subr.mxu0 0.0
    %729 = vmatpush1.msra.mxu0 0.0
    %730 = vmatprep.subr.mxu0 0.0
    %731 = vmatpush1.msra.mxu0 0.0
    %732 = vmatprep.subr.mxu0 0.0
    %733 = vmatpush1.msra.mxu0 0.0
    %734 = vmatprep.subr.mxu0 0.0
    %735 = vmatpush1.msra.mxu0 0.0
    %736 = vmatprep.subr.mxu0 0.0
    %737 = vmatpush1.msra.mxu0 0.0
    %738 = vmatprep.subr.mxu0 0.0
    %739 = vmatpush1.msra.mxu0 0.0
    %740 = vmatprep.subr.mxu0 0.0
    %741 = vmatpush1.msra.mxu0 0.0
    %742 = vmatprep.subr.mxu0 0.0
    %743 = vmatpush1.msra.mxu0 0.0
    %744 = vmatprep.subr.mxu0 0.0
    %745 = vmatpush1.msra.mxu0 0.0
    %746 = vmatprep.mubr.f32.mxu0 0.0
    %747 = vmatmul.mubr.f32.gmra.mrb[0].mxu0 %v246
    %v748 = vpop.f32.mrb[0].mxu0
    %v749 = vadd.f32 0.0, %v748
    %v750 = vpop.f32.mrb[0].mxu0
    %751 = vmatprep.mubr.f32.mxu0 0.0
    %752 = vmatmul.mubr.f32.gmra.mrb[0].mxu0 %v249
    %v753 = vpop.f32.mrb[0].mxu0
    %v754 = vadd.f32 0.0, %v753
    %v755 = vpop.f32.mrb[0].mxu0
    %756 = vmatprep.mubr.f32.mxu0 0.0
    %757 = vmatmul.mubr.f32.gmra.mrb[0].mxu0 %v252
    %v758 = vpop.f32.mrb[0].mxu0
    %v759 = vadd.f32 0.0, %v758
    %v760 = vpop.f32.mrb[0].mxu0
    %761 = vmatprep.mubr.f32.mxu0 0.0
    %762 = vmatmul.mubr.f32.gmra.mrb[0].mxu0 %v255
    %v763 = vpop.f32.mrb[0].mxu0
    %v764 = vadd.f32 0.0, %v763
    %v765 = vpop.f32.mrb[0].mxu0
    %766 = vdwg.mxu0
    %767 = vmatprep.subr.mxu0 0.0
    %768 = vmatpush1.msra.mxu0 %v223
    %769 = vmatprep.subr.mxu0 0.0
    %770 = vmatpush1.msra.mxu0 %v228
    %771 = vmatprep.subr.mxu0 0.0
    %772 = vmatpush1.msra.mxu0 0.0
    %773 = vmatprep.subr.mxu0 0.0
    %774 = vmatpush1.msra.mxu0 0.0
    %775 = vmatprep.subr.mxu0 0.0
    %776 = vmatpush1.msra.mxu0 0.0
    %777 = vmatprep.subr.mxu0 0.0
    %778 = vmatpush1.msra.mxu0 0.0
    %779 = vmatprep.subr.mxu0 0.0
    %780 = vmatpush1.msra.mxu0 0.0
    %781 = vmatprep.subr.mxu0 0.0
    %782 = vmatpush1.msra.mxu0 0.0
    %783 = vmatprep.subr.mxu0 0.0
    %784 = vmatpush1.msra.mxu0 0.0
    %785 = vmatprep.subr.mxu0 0.0
    %786 = vmatpush1.msra.mxu0 0.0
    %787 = vmatprep.subr.mxu0 0.0
    %788 = vmatpush1.msra.mxu0 0.0
    %789 = vmatprep.subr.mxu0 0.0
    %790 = vmatpush1.msra.mxu0 0.0
    %791 = vmatprep.subr.mxu0 0.0
    %792 = vmatpush1.msra.mxu0 0.0
    %793 = vmatprep.subr.mxu0 0.0
    %794 = vmatpush1.msra.mxu0 0.0
    %795 = vmatprep.subr.mxu0 0.0
    %796 = vmatpush1.msra.mxu0 0.0
    %797 = vmatprep.subr.mxu0 0.0
    %798 = vmatpush1.msra.mxu0 0.0
    %799 = vmatprep.subr.mxu0 0.0
    %800 = vmatpush1.msra.mxu0 0.0
    %801 = vmatprep.subr.mxu0 0.0
    %802 = vmatpush1.msra.mxu0 0.0
    %803 = vmatprep.subr.mxu0 0.0
    %804 = vmatpush1.msra.mxu0 0.0
    %805 = vmatprep.subr.mxu0 0.0
    %806 = vmatpush1.msra.mxu0 0.0
    %807 = vmatprep.subr.mxu0 0.0
    %808 = vmatpush1.msra.mxu0 0.0
    %809 = vmatprep.subr.mxu0 0.0
    %810 = vmatpush1.msra.mxu0 0.0
    %811 = vmatprep.subr.mxu0 0.0
    %812 = vmatpush1.msra.mxu0 0.0
    %813 = vmatprep.subr.mxu0 0.0
    %814 = vmatpush1.msra.mxu0 0.0
    %815 = vmatprep.subr.mxu0 0.0
    %816 = vmatpush1.msra.mxu0 0.0
    %817 = vmatprep.subr.mxu0 0.0
    %818 = vmatpush1.msra.mxu0 0.0
    %819 = vmatprep.subr.mxu0 0.0
    %820 = vmatpush1.msra.mxu0 0.0
    %821 = vmatprep.subr.mxu0 0.0
    %822 = vmatpush1.msra.mxu0 0.0
    %823 = vmatprep.subr.mxu0 0.0
    %824 = vmatpush1.msra.mxu0 0.0
    %825 = vmatprep.subr.mxu0 0.0
    %826 = vmatpush1.msra.mxu0 0.0
    %827 = vmatprep.subr.mxu0 0.0
    %828 = vmatpush1.msra.mxu0 0.0
    %829 = vmatprep.subr.mxu0 0.0
    %830 = vmatpush1.msra.mxu0 0.0
    %831 = vmatprep.mubr.f32.mxu0 0.0
    %832 = vmatmul.mubr.f32.gmra.mrb[0].mxu0 %v246
    %v833 = vpop.f32.mrb[0].mxu0
    %v834 = vadd.f32 0.0, %v833
    %v835 = vpop.f32.mrb[0].mxu0
    %836 = vmatprep.mubr.f32.mxu0 0.0
    %837 = vmatmul.mubr.f32.gmra.mrb[0].mxu0 %v249
    %v838 = vpop.f32.mrb[0].mxu0
    %v839 = vadd.f32 0.0, %v838
    %v840 = vpop.f32.mrb[0].mxu0
    %841 = vmatprep.mubr.f32.mxu0 0.0
    %842 = vmatmul.mubr.f32.gmra.mrb[0].mxu0 %v252
    %v843 = vpop.f32.mrb[0].mxu0
    %v844 = vadd.f32 0.0, %v843
    %v845 = vpop.f32.mrb[0].mxu0
    %846 = vmatprep.mubr.f32.mxu0 0.0
    %847 = vmatmul.mubr.f32.gmra.mrb[0].mxu0 %v255
    %v848 = vpop.f32.mrb[0].mxu0
    %v849 = vadd.f32 0.0, %v848
    %v850 = vpop.f32.mrb[0].mxu0
    %851 = vdwg.mxu0
    %852 = vmatprep.subr.mxu0 0.0
    %853 = vmatpush1.msra.mxu0 %v233
    %854 = vmatprep.subr.mxu0 0.0
    %855 = vmatpush1.msra.mxu0 %v238
    %856 = vmatprep.subr.mxu0 0.0
    %857 = vmatpush1.msra.mxu0 0.0
    %858 = vmatprep.subr.mxu0 0.0
    %859 = vmatpush1.msra.mxu0 0.0
    %860 = vmatprep.subr.mxu0 0.0
    %861 = vmatpush1.msra.mxu0 0.0
    %862 = vmatprep.subr.mxu0 0.0
    %863 = vmatpush1.msra.mxu0 0.0
    %864 = vmatprep.subr.mxu0 0.0
    %865 = vmatpush1.msra.mxu0 0.0
    %866 = vmatprep.subr.mxu0 0.0
    %867 = vmatpush1.msra.mxu0 0.0
    %868 = vmatprep.subr.mxu0 0.0
    %869 = vmatpush1.msra.mxu0 0.0
    %870 = vmatprep.subr.mxu0 0.0
    %871 = vmatpush1.msra.mxu0 0.0
    %872 = vmatprep.subr.mxu0 0.0
    %873 = vmatpush1.msra.mxu0 0.0
    %874 = vmatprep.subr.mxu0 0.0
    %875 = vmatpush1.msra.mxu0 0.0
    %876 = vmatprep.subr.mxu0 0.0
    %877 = vmatpush1.msra.mxu0 0.0
    %878 = vmatprep.subr.mxu0 0.0
    %879 = vmatpush1.msra.mxu0 0.0
    %880 = vmatprep.subr.mxu0 0.0
    %881 = vmatpush1.msra.mxu0 0.0
    %882 = vmatprep.subr.mxu0 0.0
    %883 = vmatpush1.msra.mxu0 0.0
    %884 = vmatprep.subr.mxu0 0.0
    %885 = vmatpush1.msra.mxu0 0.0
    %886 = vmatprep.subr.mxu0 0.0
    %887 = vmatpush1.msra.mxu0 0.0
    %888 = vmatprep.subr.mxu0 0.0
    %889 = vmatpush1.msra.mxu0 0.0
    %890 = vmatprep.subr.mxu0 0.0
    %891 = vmatpush1.msra.mxu0 0.0
    %892 = vmatprep.subr.mxu0 0.0
    %893 = vmatpush1.msra.mxu0 0.0
    %894 = vmatprep.subr.mxu0 0.0
    %895 = vmatpush1.msra.mxu0 0.0
    %896 = vmatprep.subr.mxu0 0.0
    %897 = vmatpush1.msra.mxu0 0.0
    %898 = vmatprep.subr.mxu0 0.0
    %899 = vmatpush1.msra.mxu0 0.0
    %900 = vmatprep.subr.mxu0 0.0
    %901 = vmatpush1.msra.mxu0 0.0
    %902 = vmatprep.subr.mxu0 0.0
    %903 = vmatpush1.msra.mxu0 0.0
    %904 = vmatprep.subr.mxu0 0.0
    %905 = vmatpush1.msra.mxu0 0.0
    %906 = vmatprep.subr.mxu0 0.0
    %907 = vmatpush1.msra.mxu0 0.0
    %908 = vmatprep.subr.mxu0 0.0
    %909 = vmatpush1.msra.mxu0 0.0
    %910 = vmatprep.subr.mxu0 0.0
    %911 = vmatpush1.msra.mxu0 0.0
    %912 = vmatprep.subr.mxu0 0.0
    %913 = vmatpush1.msra.mxu0 0.0
    %914 = vmatprep.subr.mxu0 0.0
    %915 = vmatpush1.msra.mxu0 0.0
    %916 = vmatprep.mubr.f32.mxu0 0.0
    %917 = vmatmul.mubr.f32.gmra.mrb[0].mxu0 %v246
    %v918 = vpop.f32.mrb[0].mxu0
    %v919 = vadd.f32 0.0, %v918
    %v920 = vpop.f32.mrb[0].mxu0
    %921 = vmatprep.mubr.f32.mxu0 0.0
    %922 = vmatmul.mubr.f32.gmra.mrb[0].mxu0 %v249
    %v923 = vpop.f32.mrb[0].mxu0
    %v924 = vadd.f32 0.0, %v923
    %v925 = vpop.f32.mrb[0].mxu0
    %926 = vmatprep.mubr.f32.mxu0 0.0
    %927 = vmatmul.mubr.f32.gmra.mrb[0].mxu0 %v252
    %v928 = vpop.f32.mrb[0].mxu0
    %v929 = vadd.f32 0.0, %v928
    %v930 = vpop.f32.mrb[0].mxu0
    %931 = vmatprep.mubr.f32.mxu0 0.0
    %932 = vmatmul.mubr.f32.gmra.mrb[0].mxu0 %v255
    %v933 = vpop.f32.mrb[0].mxu0
    %v934 = vadd.f32 0.0, %v933
    %v935 = vpop.f32.mrb[0].mxu0
    %936 = vdwg.mxu0
    %937 = vst [vmem:[#allocation5] sm:$0xff] %v324
    %938 = vst [vmem:[#allocation5 + $0x8] sm:$0xff] %v329
    %939 = vst [vmem:[#allocation5 + $0x10] sm:$0xff] %v334
    %940 = vst [vmem:[#allocation5 + $0x18] sm:$0xff] %v339
    %941 = vst [vmem:[#allocation5 + $0x20] sm:$0xff] %v409
    %942 = vst [vmem:[#allocation5 + $0x28] sm:$0xff] %v414
    %943 = vst [vmem:[#allocation5 + $0x30] sm:$0xff] %v419
    %944 = vst [vmem:[#allocation5 + $0x38] sm:$0xff] %v424
    %945 = vst [vmem:[#allocation5 + $0x40] sm:$0xff] %v494
    %946 = vst [vmem:[#allocation5 + $0x48] sm:$0xff] %v499
    %947 = vst [vmem:[#allocation5 + $0x50] sm:$0xff] %v504
    %948 = vst [vmem:[#allocation5 + $0x58] sm:$0xff] %v509
    %949 = vst [vmem:[#allocation5 + $0x60] sm:$0xff] %v579
    %950 = vst [vmem:[#allocation5 + $0x68] sm:$0xff] %v584
    %951 = vst [vmem:[#allocation5 + $0x70] sm:$0xff] %v589
    %952 = vst [vmem:[#allocation5 + $0x78] sm:$0xff] %v594
    %953 = vst [vmem:[#allocation5 + $0x80] sm:$0xff] %v664
    %954 = vst [vmem:[#allocation5 + $0x88] sm:$0xff] %v669
    %955 = vst [vmem:[#allocation5 + $0x90] sm:$0xff] %v674
    %956 = vst [vmem:[#allocation5 + $0x98] sm:$0xff] %v679
    %957 = vst [vmem:[#allocation5 + $0xa0] sm:$0xff] %v749
    %958 = vst [vmem:[#allocation5 + $0xa8] sm:$0xff] %v754
    %959 = vst [vmem:[#allocation5 + $0xb0] sm:$0xff] %v759
    %960 = vst [vmem:[#allocation5 + $0xb8] sm:$0xff] %v764
    %961 = vst [vmem:[#allocation5 + $0xc0] sm:$0xff] %v834
    %962 = vst [vmem:[#allocation5 + $0xc8] sm:$0xff] %v839
    %963 = vst [vmem:[#allocation5 + $0xd0] sm:$0xff] %v844
    %964 = vst [vmem:[#allocation5 + $0xd8] sm:$0xff] %v849
    %965 = vst [vmem:[#allocation5 + $0xe0] sm:$0xff] %v919
    %966 = vst [vmem:[#allocation5 + $0xe8] sm:$0xff] %v924
    %967 = vst [vmem:[#allocation5 + $0xf0] sm:$0xff] %v929
    %968 = vst [vmem:[#allocation5 + $0xf8] sm:$0xff] %v934
    // Predicated region
    $region18: #{tpu_custom_call.1} parent=1 // pred_check
      _
    $region19: #{tpu_custom_call.1} parent=1 // pred_check_branch
      %970 = sbr.rel (0) target = $region21
    $region20: #{tpu_custom_call.1} parent=1 // pred_region
      %s972 = ssub.s32 4096, 4096
      %973 = vsyncadd [#allocation4], %s972
      %s974 = sshll.u32 [#allocation5], 4
      %s975 = int_to_ptr.vmem [resolvable:$true] %s974
      %980 = dma.vmem_to_hbm [thread:$0]  %s975, 4096, %s3, [#allocation4], 128, 128, 8
    $region21: #{tpu_custom_call.1} parent=1 // pred_fallthru
      _
    // Predicated region
    $region22: #{tpu_custom_call.1} parent=1 // pred_check
      _
    $region23: #{tpu_custom_call.1} parent=1 // pred_check_branch
      %982 = sbr.rel (0) target = $region25
    $region24: #{tpu_custom_call.1} parent=1 // pred_region
      %983 = dma.done [#allocation4], 4096
    $region25: #{tpu_custom_call.1} parent=1 // pred_fallthru
      _
    %984 = vsyncpa [#allocation3], 1
    %985 = vsyncpa [#allocation4], 1

// kernel: tpu_custom_call.1
$region0: #{tpu_custom_call.1}
  #allocation0 [shape = 'u32[]', space=smem, size = 0x4, offset = 0x4, fixed_abs, tag = 'smem constant byte address 0x4 - core index']
  #allocation1 [shape = 'u32[144,128]{1,0:T(1,128)}', space=vmem, size = 0x12000, scoped, tag = 'internal scratch']
  %s0 = inlined_call_operand.hbm [shape: f32[8,16,16], index: 0, kind: input, shape index: {}]
  %s1 = inlined_call_operand.vmem [shape: f32[32,16], index: 1, kind: input, shape index: {}]
  %s2 = inlined_call_operand.vmem [shape: f32[16,128], index: 2, kind: input, shape index: {}]
  %s3 = inlined_call_operand.hbm [shape: f32[8,32,128], index: 3, kind: output, shape index: {}]
  %s4 = sld [smem:[#allocation0]]
  $region26: #{tpu_custom_call.1} parent=0
    _
  %s6 = ssub.s32 1, %s4
  %s7 = scalar_select 0, %s6, %s4
  $region1: #{tpu_custom_call.1} parent=0
    #allocation2 [shape = 'u8[65536]{0}', space=vmem, size = 0x10000, scoped, tag = 'input window, operand 0, single buffered']
    #allocation3 [shape = 's32[1]{0}', space=sflag, size = 0x4, scoped, tag = 'scoped memory for tpu_custom_call.1']
    #allocation4 [shape = 's32[1]{0}', space=sflag, size = 0x4, scoped, tag = 'scoped memory for tpu_custom_call.1']
    #allocation5 [shape = 'u8[131072]{0}', space=vmem, size = 0x20000, scoped, tag = 'output window, operand 0, single buffered']
    %8 = vsyncpa [#allocation3], 0
    %9 = vsyncpa [#allocation4], 0
    // Predicated region
    $region2: #{tpu_custom_call.1} parent=1 // pred_check
      _
    $region3: #{tpu_custom_call.1} parent=1 // pred_check_branch
      %11 = sbr.rel (0) target = $region5
    $region4: #{tpu_custom_call.1} parent=1 // pred_region
      %s13 = ssub.s32 2048, 2048
      %14 = vsyncadd [#allocation3], %s13
      %s15 = sshll.u32 [#allocation2], 4
      %s16 = int_to_ptr.vmem [resolvable:$true] %s15
      %21 = dma.hbm_to_vmem [thread:$0]  %s0, 2048, %s16, [#allocation3], 128, 128, 8
    $region5: #{tpu_custom_call.1} parent=1 // pred_fallthru
      _
    // Predicated region
    $region6: #{tpu_custom_call.1} parent=1 // pred_check
      _
    $region7: #{tpu_custom_call.1} parent=1 // pred_check_branch
      %23 = sbr.rel (0) target = $region9
    $region8: #{tpu_custom_call.1} parent=1 // pred_region
      _
    $region9: #{tpu_custom_call.1} parent=1 // pred_fallthru
      _
    // Predicated region
    $region10: #{tpu_custom_call.1} parent=1 // pred_check
      _
    $region11: #{tpu_custom_call.1} parent=1 // pred_check_branch
      %25 = sbr.rel (0) target = $region13
    $region12: #{tpu_custom_call.1} parent=1 // pred_region
      _
    $region13: #{tpu_custom_call.1} parent=1 // pred_fallthru
      _
    // Predicated region
    $region14: #{tpu_custom_call.1} parent=1 // pred_check
      _
    $region15: #{tpu_custom_call.1} parent=1 // pred_check_branch
      %27 = sbr.rel (0) target = $region17
    $region16: #{tpu_custom_call.1} parent=1 // pred_region
      %28 = dma.done [#allocation3], 2048
    $region17: #{tpu_custom_call.1} parent=1 // pred_fallthru
      _
    %v29 = vld [vmem:[#allocation2] sm:$0xff]
    %v30 = vld [vmem:[#allocation2 + $0x8] sm:$0xff]
    %v31 = vld [vmem:[#allocation2 + $0x10] sm:$0xff]
    %v32 = vld [vmem:[#allocation2 + $0x18] sm:$0xff]
    %v33 = vld [vmem:[#allocation2 + $0x20] sm:$0xff]
    %v34 = vld [vmem:[#allocation2 + $0x28] sm:$0xff]
    %v35 = vld [vmem:[#allocation2 + $0x30] sm:$0xff]
    %v36 = vld [vmem:[#allocation2 + $0x38] sm:$0xff]
    %v37 = vld [vmem:[#allocation2 + $0x40] sm:$0xff]
    %v38 = vld [vmem:[#allocation2 + $0x48] sm:$0xff]
    %v39 = vld [vmem:[#allocation2 + $0x50] sm:$0xff]
    %v40 = vld [vmem:[#allocation2 + $0x58] sm:$0xff]
    %v41 = vld [vmem:[#allocation2 + $0x60] sm:$0xff]
    %v42 = vld [vmem:[#allocation2 + $0x68] sm:$0xff]
    %v43 = vld [vmem:[#allocation2 + $0x70] sm:$0xff]
    %v44 = vld [vmem:[#allocation2 + $0x78] sm:$0xff]
    %v45 = vld [vmem:[%s2] sm:$0xff]
    %v46 = vld [vmem:[%s2 + $0x8] sm:$0xff]
    %vm47 = vcmask 130048
    %v49 = vsel %vm47, %v29, 0
    %v52 = vsel %vm47, %v30, 0
    %v55 = vsel %vm47, %v31, 0
    %v58 = vsel %vm47, %v32, 0
    %v61 = vsel %vm47, %v33, 0
    %v64 = vsel %vm47, %v34, 0
    %v67 = vsel %vm47, %v35, 0
    %v70 = vsel %vm47, %v36, 0
    %v73 = vsel %vm47, %v37, 0
    %v76 = vsel %vm47, %v38, 0
    %v79 = vsel %vm47, %v39, 0
    %v82 = vsel %vm47, %v40, 0
    %v85 = vsel %vm47, %v41, 0
    %v88 = vsel %vm47, %v42, 0
    %v91 = vsel %vm47, %v43, 0
    %v94 = vsel %vm47, %v44, 0
    %96 = vmatprep.subr.mxu0 0.0
    %97 = vmatpush1.msra.mxu0 %v45
    %98 = vmatprep.subr.mxu0 0.0
    %99 = vmatpush1.msra.mxu0 %v46
    %100 = vmatprep.subr.mxu0 0.0
    %101 = vmatpush1.msra.mxu0 0.0
    %102 = vmatprep.subr.mxu0 0.0
    %103 = vmatpush1.msra.mxu0 0.0
    %104 = vmatprep.subr.mxu0 0.0
    %105 = vmatpush1.msra.mxu0 0.0
    %106 = vmatprep.subr.mxu0 0.0
    %107 = vmatpush1.msra.mxu0 0.0
    %108 = vmatprep.subr.mxu0 0.0
    %109 = vmatpush1.msra.mxu0 0.0
    %110 = vmatprep.subr.mxu0 0.0
    %111 = vmatpush1.msra.mxu0 0.0
    %112 = vmatprep.subr.mxu0 0.0
    %113 = vmatpush1.msra.mxu0 0.0
    %114 = vmatprep.subr.mxu0 0.0
    %115 = vmatpush1.msra.mxu0 0.0
    %116 = vmatprep.subr.mxu0 0.0
    %117 = vmatpush1.msra.mxu0 0.0
    %118 = vmatprep.subr.mxu0 0.0
    %119 = vmatpush1.msra.mxu0 0.0
    %120 = vmatprep.subr.mxu0 0.0
    %121 = vmatpush1.msra.mxu0 0.0
    %122 = vmatprep.subr.mxu0 0.0
    %123 = vmatpush1.msra.mxu0 0.0
    %124 = vmatprep.subr.mxu0 0.0
    %125 = vmatpush1.msra.mxu0 0.0
    %126 = vmatprep.subr.mxu0 0.0
    %127 = vmatpush1.msra.mxu0 0.0
    %128 = vmatprep.subr.mxu0 0.0
    %129 = vmatpush1.msra.mxu0 0.0
    %130 = vmatprep.subr.mxu0 0.0
    %131 = vmatpush1.msra.mxu0 0.0
    %132 = vmatprep.subr.mxu0 0.0
    %133 = vmatpush1.msra.mxu0 0.0
    %134 = vmatprep.subr.mxu0 0.0
    %135 = vmatpush1.msra.mxu0 0.0
    %136 = vmatprep.subr.mxu0 0.0
    %137 = vmatpush1.msra.mxu0 0.0
    %138 = vmatprep.subr.mxu0 0.0
    %139 = vmatpush1.msra.mxu0 0.0
    %140 = vmatprep.subr.mxu0 0.0
    %141 = vmatpush1.msra.mxu0 0.0
    %142 = vmatprep.subr.mxu0 0.0
    %143 = vmatpush1.msra.mxu0 0.0
    %144 = vmatprep.subr.mxu0 0.0
    %145 = vmatpush1.msra.mxu0 0.0
    %146 = vmatprep.subr.mxu0 0.0
    %147 = vmatpush1.msra.mxu0 0.0
    %148 = vmatprep.subr.mxu0 0.0
    %149 = vmatpush1.msra.mxu0 0.0
    %150 = vmatprep.subr.mxu0 0.0
    %151 = vmatpush1.msra.mxu0 0.0
    %152 = vmatprep.subr.mxu0 0.0
    %153 = vmatpush1.msra.mxu0 0.0
    %154 = vmatprep.subr.mxu0 0.0
    %155 = vmatpush1.msra.mxu0 0.0
    %156 = vmatprep.subr.mxu0 0.0
    %157 = vmatpush1.msra.mxu0 0.0
    %158 = vmatprep.subr.mxu0 0.0
    %159 = vmatpush1.msra.mxu0 0.0
    %160 = vmatprep.mubr.f32.mxu0 0.0
    %161 = vmatmul.mubr.f32.gmra.mrb[0].mxu0 %v49
    %v162 = vpop.f32.mrb[0].mxu0
    %v163 = vadd.f32 0.0, %v162
    %v164 = vpop.f32.mrb[0].mxu0
    %165 = vmatprep.mubr.f32.mxu0 0.0
    %166 = vmatmul.mubr.f32.gmra.mrb[0].mxu0 %v52
    %v167 = vpop.f32.mrb[0].mxu0
    %v168 = vadd.f32 0.0, %v167
    %v169 = vpop.f32.mrb[0].mxu0
    %170 = vmatprep.mubr.f32.mxu0 0.0
    %171 = vmatmul.mubr.f32.gmra.mrb[0].mxu0 %v55
    %v172 = vpop.f32.mrb[0].mxu0
    %v173 = vadd.f32 0.0, %v172
    %v174 = vpop.f32.mrb[0].mxu0
    %175 = vmatprep.mubr.f32.mxu0 0.0
    %176 = vmatmul.mubr.f32.gmra.mrb[0].mxu0 %v58
    %v177 = vpop.f32.mrb[0].mxu0
    %v178 = vadd.f32 0.0, %v177
    %v179 = vpop.f32.mrb[0].mxu0
    %180 = vmatprep.mubr.f32.mxu0 0.0
    %181 = vmatmul.mubr.f32.gmra.mrb[0].mxu0 %v61
    %v182 = vpop.f32.mrb[0].mxu0
    %v183 = vadd.f32 0.0, %v182
    %v184 = vpop.f32.mrb[0].mxu0
    %185 = vmatprep.mubr.f32.mxu0 0.0
    %186 = vmatmul.mubr.f32.gmra.mrb[0].mxu0 %v64
    %v187 = vpop.f32.mrb[0].mxu0
    %v188 = vadd.f32 0.0, %v187
    %v189 = vpop.f32.mrb[0].mxu0
    %190 = vmatprep.mubr.f32.mxu0 0.0
    %191 = vmatmul.mubr.f32.gmra.mrb[0].mxu0 %v67
    %v192 = vpop.f32.mrb[0].mxu0
    %v193 = vadd.f32 0.0, %v192
    %v194 = vpop.f32.mrb[0].mxu0
    %195 = vmatprep.mubr.f32.mxu0 0.0
    %196 = vmatmul.mubr.f32.gmra.mrb[0].mxu0 %v70
    %v197 = vpop.f32.mrb[0].mxu0
    %v198 = vadd.f32 0.0, %v197
    %v199 = vpop.f32.mrb[0].mxu0
    %200 = vmatprep.mubr.f32.mxu0 0.0
    %201 = vmatmul.mubr.f32.gmra.mrb[0].mxu0 %v73
    %v202 = vpop.f32.mrb[0].mxu0
    %v203 = vadd.f32 0.0, %v202
    %v204 = vpop.f32.mrb[0].mxu0
    %205 = vmatprep.mubr.f32.mxu0 0.0
    %206 = vmatmul.mubr.f32.gmra.mrb[0].mxu0 %v76
    %v207 = vpop.f32.mrb[0].mxu0
    %v208 = vadd.f32 0.0, %v207
    %v209 = vpop.f32.mrb[0].mxu0
    %210 = vmatprep.mubr.f32.mxu0 0.0
    %211 = vmatmul.mubr.f32.gmra.mrb[0].mxu0 %v79
    %v212 = vpop.f32.mrb[0].mxu0
    %v213 = vadd.f32 0.0, %v212
    %v214 = vpop.f32.mrb[0].mxu0
    %215 = vmatprep.mubr.f32.mxu0 0.0
    %216 = vmatmul.mubr.f32.gmra.mrb[0].mxu0 %v82
    %v217 = vpop.f32.mrb[0].mxu0
    %v218 = vadd.f32 0.0, %v217
    %v219 = vpop.f32.mrb[0].mxu0
    %220 = vmatprep.mubr.f32.mxu0 0.0
    %221 = vmatmul.mubr.f32.gmra.mrb[0].mxu0 %v85
    %v222 = vpop.f32.mrb[0].mxu0
    %v223 = vadd.f32 0.0, %v222
    %v224 = vpop.f32.mrb[0].mxu0
    %225 = vmatprep.mubr.f32.mxu0 0.0
    %226 = vmatmul.mubr.f32.gmra.mrb[0].mxu0 %v88
    %v227 = vpop.f32.mrb[0].mxu0
    %v228 = vadd.f32 0.0, %v227
    %v229 = vpop.f32.mrb[0].mxu0
    %230 = vmatprep.mubr.f32.mxu0 0.0
    %231 = vmatmul.mubr.f32.gmra.mrb[0].mxu0 %v91
    %v232 = vpop.f32.mrb[0].mxu0
    %v233 = vadd.f32 0.0, %v232
    %v234 = vpop.f32.mrb[0].mxu0
    %235 = vmatprep.mubr.f32.mxu0 0.0
    %236 = vmatmul.mubr.f32.gmra.mrb[0].mxu0 %v94
    %v237 = vpop.f32.mrb[0].mxu0
    %v238 = vadd.f32 0.0, %v237
    %v239 = vpop.f32.mrb[0].mxu0
    %240 = vdwg.mxu0
    %v241 = vld [vmem:[%s1] sm:$0xff]
    %v242 = vld [vmem:[%s1 + $0x8] sm:$0xff]
    %v243 = vld [vmem:[%s1 + $0x10] sm:$0xff]
    %v244 = vld [vmem:[%s1 + $0x18] sm:$0xff]
    %v246 = vsel %vm47, %v241, 0
    %v249 = vsel %vm47, %v242, 0
    %v252 = vsel %vm47, %v243, 0
    %v255 = vsel %vm47, %v244, 0
    %257 = vmatprep.subr.mxu0 0.0
    %258 = vmatpush1.msra.mxu0 %v163
    %259 = vmatprep.subr.mxu0 0.0
    %260 = vmatpush1.msra.mxu0 %v168
    %261 = vmatprep.subr.mxu0 0.0
    %262 = vmatpush1.msra.mxu0 0.0
    %263 = vmatprep.subr.mxu0 0.0
    %264 = vmatpush1.msra.mxu0 0.0
    %265 = vmatprep.subr.mxu0 0.0
    %266 = vmatpush1.msra.mxu0 0.0
    %267 = vmatprep.subr.mxu0 0.0
    %268 = vmatpush1.msra.mxu0 0.0
    %269 = vmatprep.subr.mxu0 0.0
    %270 = vmatpush1.msra.mxu0 0.0
    %271 = vmatprep.subr.mxu0 0.0
    %272 = vmatpush1.msra.mxu0 0.0
    %273 = vmatprep.subr.mxu0 0.0
    %274 = vmatpush1.msra.mxu0 0.0
    %275 = vmatprep.subr.mxu0 0.0
    %276 = vmatpush1.msra.mxu0 0.0
    %277 = vmatprep.subr.mxu0 0.0
    %278 = vmatpush1.msra.mxu0 0.0
    %279 = vmatprep.subr.mxu0 0.0
    %280 = vmatpush1.msra.mxu0 0.0
    %281 = vmatprep.subr.mxu0 0.0
    %282 = vmatpush1.msra.mxu0 0.0
    %283 = vmatprep.subr.mxu0 0.0
    %284 = vmatpush1.msra.mxu0 0.0
    %285 = vmatprep.subr.mxu0 0.0
    %286 = vmatpush1.msra.mxu0 0.0
    %287 = vmatprep.subr.mxu0 0.0
    %288 = vmatpush1.msra.mxu0 0.0
    %289 = vmatprep.subr.mxu0 0.0
    %290 = vmatpush1.msra.mxu0 0.0
    %291 = vmatprep.subr.mxu0 0.0
    %292 = vmatpush1.msra.mxu0 0.0
    %293 = vmatprep.subr.mxu0 0.0
    %294 = vmatpush1.msra.mxu0 0.0
    %295 = vmatprep.subr.mxu0 0.0
    %296 = vmatpush1.msra.mxu0 0.0
    %297 = vmatprep.subr.mxu0 0.0
    %298 = vmatpush1.msra.mxu0 0.0
    %299 = vmatprep.subr.mxu0 0.0
    %300 = vmatpush1.msra.mxu0 0.0
    %301 = vmatprep.subr.mxu0 0.0
    %302 = vmatpush1.msra.mxu0 0.0
    %303 = vmatprep.subr.mxu0 0.0
    %304 = vmatpush1.msra.mxu0 0.0
    %305 = vmatprep.subr.mxu0 0.0
    %306 = vmatpush1.msra.mxu0 0.0
    %307 = vmatprep.subr.mxu0 0.0
    %308 = vmatpush1.msra.mxu0 0.0
    %309 = vmatprep.subr.mxu0 0.0
    %310 = vmatpush1.msra.mxu0 0.0
    %311 = vmatprep.subr.mxu0 0.0
    %312 = vmatpush1.msra.mxu0 0.0
    %313 = vmatprep.subr.mxu0 0.0
    %314 = vmatpush1.msra.mxu0 0.0
    %315 = vmatprep.subr.mxu0 0.0
    %316 = vmatpush1.msra.mxu0 0.0
    %317 = vmatprep.subr.mxu0 0.0
    %318 = vmatpush1.msra.mxu0 0.0
    %319 = vmatprep.subr.mxu0 0.0
    %320 = vmatpush1.msra.mxu0 0.0
    %321 = vmatprep.mubr.f32.mxu0 0.0
    %322 = vmatmul.mubr.f32.gmra.mrb[0].mxu0 %v246
    %v323 = vpop.f32.mrb[0].mxu0
    %v324 = vadd.f32 0.0, %v323
    %v325 = vpop.f32.mrb[0].mxu0
    %326 = vmatprep.mubr.f32.mxu0 0.0
    %327 = vmatmul.mubr.f32.gmra.mrb[0].mxu0 %v249
    %v328 = vpop.f32.mrb[0].mxu0
    %v329 = vadd.f32 0.0, %v328
    %v330 = vpop.f32.mrb[0].mxu0
    %331 = vmatprep.mubr.f32.mxu0 0.0
    %332 = vmatmul.mubr.f32.gmra.mrb[0].mxu0 %v252
    %v333 = vpop.f32.mrb[0].mxu0
    %v334 = vadd.f32 0.0, %v333
    %v335 = vpop.f32.mrb[0].mxu0
    %336 = vmatprep.mubr.f32.mxu0 0.0
    %337 = vmatmul.mubr.f32.gmra.mrb[0].mxu0 %v255
    %v338 = vpop.f32.mrb[0].mxu0
    %v339 = vadd.f32 0.0, %v338
    %v340 = vpop.f32.mrb[0].mxu0
    %341 = vdwg.mxu0
    %342 = vmatprep.subr.mxu0 0.0
    %343 = vmatpush1.msra.mxu0 %v173
    %344 = vmatprep.subr.mxu0 0.0
    %345 = vmatpush1.msra.mxu0 %v178
    %346 = vmatprep.subr.mxu0 0.0
    %347 = vmatpush1.msra.mxu0 0.0
    %348 = vmatprep.subr.mxu0 0.0
    %349 = vmatpush1.msra.mxu0 0.0
    %350 = vmatprep.subr.mxu0 0.0
    %351 = vmatpush1.msra.mxu0 0.0
    %352 = vmatprep.subr.mxu0 0.0
    %353 = vmatpush1.msra.mxu0 0.0
    %354 = vmatprep.subr.mxu0 0.0
    %355 = vmatpush1.msra.mxu0 0.0
    %356 = vmatprep.subr.mxu0 0.0
    %357 = vmatpush1.msra.mxu0 0.0
    %358 = vmatprep.subr.mxu0 0.0
    %359 = vmatpush1.msra.mxu0 0.0
    %360 = vmatprep.subr.mxu0 0.0
    %361 = vmatpush1.msra.mxu0 0.0
    %362 = vmatprep.subr.mxu0 0.0
    %363 = vmatpush1.msra.mxu0 0.0
    %364 = vmatprep.subr.mxu0 0.0
    %365 = vmatpush1.msra.mxu0 0.0
    %366 = vmatprep.subr.mxu0 0.0
    %367 = vmatpush1.msra.mxu0 0.0
    %368 = vmatprep.subr.mxu0 0.0
    %369 = vmatpush1.msra.mxu0 0.0
    %370 = vmatprep.subr.mxu0 0.0
    %371 = vmatpush1.msra.mxu0 0.0
    %372 = vmatprep.subr.mxu0 0.0
    %373 = vmatpush1.msra.mxu0 0.0
    %374 = vmatprep.subr.mxu0 0.0
    %375 = vmatpush1.msra.mxu0 0.0
    %376 = vmatprep.subr.mxu0 0.0
    %377 = vmatpush1.msra.mxu0 0.0
    %378 = vmatprep.subr.mxu0 0.0
    %379 = vmatpush1.msra.mxu0 0.0
    %380 = vmatprep.subr.mxu0 0.0
    %381 = vmatpush1.msra.mxu0 0.0
    %382 = vmatprep.subr.mxu0 0.0
    %383 = vmatpush1.msra.mxu0 0.0
    %384 = vmatprep.subr.mxu0 0.0
    %385 = vmatpush1.msra.mxu0 0.0
    %386 = vmatprep.subr.mxu0 0.0
    %387 = vmatpush1.msra.mxu0 0.0
    %388 = vmatprep.subr.mxu0 0.0
    %389 = vmatpush1.msra.mxu0 0.0
    %390 = vmatprep.subr.mxu0 0.0
    %391 = vmatpush1.msra.mxu0 0.0
    %392 = vmatprep.subr.mxu0 0.0
    %393 = vmatpush1.msra.mxu0 0.0
    %394 = vmatprep.subr.mxu0 0.0
    %395 = vmatpush1.msra.mxu0 0.0
    %396 = vmatprep.subr.mxu0 0.0
    %397 = vmatpush1.msra.mxu0 0.0
    %398 = vmatprep.subr.mxu0 0.0
    %399 = vmatpush1.msra.mxu0 0.0
    %400 = vmatprep.subr.mxu0 0.0
    %401 = vmatpush1.msra.mxu0 0.0
    %402 = vmatprep.subr.mxu0 0.0
    %403 = vmatpush1.msra.mxu0 0.0
    %404 = vmatprep.subr.mxu0 0.0
    %405 = vmatpush1.msra.mxu0 0.0
    %406 = vmatprep.mubr.f32.mxu0 0.0
    %407 = vmatmul.mubr.f32.gmra.mrb[0].mxu0 %v246
    %v408 = vpop.f32.mrb[0].mxu0
    %v409 = vadd.f32 0.0, %v408
    %v410 = vpop.f32.mrb[0].mxu0
    %411 = vmatprep.mubr.f32.mxu0 0.0
    %412 = vmatmul.mubr.f32.gmra.mrb[0].mxu0 %v249
    %v413 = vpop.f32.mrb[0].mxu0
    %v414 = vadd.f32 0.0, %v413
    %v415 = vpop.f32.mrb[0].mxu0
    %416 = vmatprep.mubr.f32.mxu0 0.0
    %417 = vmatmul.mubr.f32.gmra.mrb[0].mxu0 %v252
    %v418 = vpop.f32.mrb[0].mxu0
    %v419 = vadd.f32 0.0, %v418
    %v420 = vpop.f32.mrb[0].mxu0
    %421 = vmatprep.mubr.f32.mxu0 0.0
    %422 = vmatmul.mubr.f32.gmra.mrb[0].mxu0 %v255
    %v423 = vpop.f32.mrb[0].mxu0
    %v424 = vadd.f32 0.0, %v423
    %v425 = vpop.f32.mrb[0].mxu0
    %426 = vdwg.mxu0
    %427 = vmatprep.subr.mxu0 0.0
    %428 = vmatpush1.msra.mxu0 %v183
    %429 = vmatprep.subr.mxu0 0.0
    %430 = vmatpush1.msra.mxu0 %v188
    %431 = vmatprep.subr.mxu0 0.0
    %432 = vmatpush1.msra.mxu0 0.0
    %433 = vmatprep.subr.mxu0 0.0
    %434 = vmatpush1.msra.mxu0 0.0
    %435 = vmatprep.subr.mxu0 0.0
    %436 = vmatpush1.msra.mxu0 0.0
    %437 = vmatprep.subr.mxu0 0.0
    %438 = vmatpush1.msra.mxu0 0.0
    %439 = vmatprep.subr.mxu0 0.0
    %440 = vmatpush1.msra.mxu0 0.0
    %441 = vmatprep.subr.mxu0 0.0
    %442 = vmatpush1.msra.mxu0 0.0
    %443 = vmatprep.subr.mxu0 0.0
    %444 = vmatpush1.msra.mxu0 0.0
    %445 = vmatprep.subr.mxu0 0.0
    %446 = vmatpush1.msra.mxu0 0.0
    %447 = vmatprep.subr.mxu0 0.0
    %448 = vmatpush1.msra.mxu0 0.0
    %449 = vmatprep.subr.mxu0 0.0
    %450 = vmatpush1.msra.mxu0 0.0
    %451 = vmatprep.subr.mxu0 0.0
    %452 = vmatpush1.msra.mxu0 0.0
    %453 = vmatprep.subr.mxu0 0.0
    %454 = vmatpush1.msra.mxu0 0.0
    %455 = vmatprep.subr.mxu0 0.0
    %456 = vmatpush1.msra.mxu0 0.0
    %457 = vmatprep.subr.mxu0 0.0
    %458 = vmatpush1.msra.mxu0 0.0
    %459 = vmatprep.subr.mxu0 0.0
    %460 = vmatpush1.msra.mxu0 0.0
    %461 = vmatprep.subr.mxu0 0.0
    %462 = vmatpush1.msra.mxu0 0.0
    %463 = vmatprep.subr.mxu0 0.0
    %464 = vmatpush1.msra.mxu0 0.0
    %465 = vmatprep.subr.mxu0 0.0
    %466 = vmatpush1.msra.mxu0 0.0
    %467 = vmatprep.subr.mxu0 0.0
    %468 = vmatpush1.msra.mxu0 0.0
    %469 = vmatprep.subr.mxu0 0.0
    %470 = vmatpush1.msra.mxu0 0.0
    %471 = vmatprep.subr.mxu0 0.0
    %472 = vmatpush1.msra.mxu0 0.0
    %473 = vmatprep.subr.mxu0 0.0
    %474 = vmatpush1.msra.mxu0 0.0
    %475 = vmatprep.subr.mxu0 0.0
    %476 = vmatpush1.msra.mxu0 0.0
    %477 = vmatprep.subr.mxu0 0.0
    %478 = vmatpush1.msra.mxu0 0.0
    %479 = vmatprep.subr.mxu0 0.0
    %480 = vmatpush1.msra.mxu0 0.0
    %481 = vmatprep.subr.mxu0 0.0
    %482 = vmatpush1.msra.mxu0 0.0
    %483 = vmatprep.subr.mxu0 0.0
    %484 = vmatpush1.msra.mxu0 0.0
    %485 = vmatprep.subr.mxu0 0.0
    %486 = vmatpush1.msra.mxu0 0.0
    %487 = vmatprep.subr.mxu0 0.0
    %488 = vmatpush1.msra.mxu0 0.0
    %489 = vmatprep.subr.mxu0 0.0
    %490 = vmatpush1.msra.mxu0 0.0
    %491 = vmatprep.mubr.f32.mxu0 0.0
    %492 = vmatmul.mubr.f32.gmra.mrb[0].mxu0 %v246
    %v493 = vpop.f32.mrb[0].mxu0
    %v494 = vadd.f32 0.0, %v493
    %v495 = vpop.f32.mrb[0].mxu0
    %496 = vmatprep.mubr.f32.mxu0 0.0
    %497 = vmatmul.mubr.f32.gmra.mrb[0].mxu0 %v249
    %v498 = vpop.f32.mrb[0].mxu0
    %v499 = vadd.f32 0.0, %v498
    %v500 = vpop.f32.mrb[0].mxu0
    %501 = vmatprep.mubr.f32.mxu0 0.0
    %502 = vmatmul.mubr.f32.gmra.mrb[0].mxu0 %v252
    %v503 = vpop.f32.mrb[0].mxu0
    %v504 = vadd.f32 0.0, %v503
    %v505 = vpop.f32.mrb[0].mxu0
    %506 = vmatprep.mubr.f32.mxu0 0.0
    %507 = vmatmul.mubr.f32.gmra.mrb[0].mxu0 %v255
    %v508 = vpop.f32.mrb[0].mxu0
    %v509 = vadd.f32 0.0, %v508
    %v510 = vpop.f32.mrb[0].mxu0
    %511 = vdwg.mxu0
    %512 = vmatprep.subr.mxu0 0.0
    %513 = vmatpush1.msra.mxu0 %v193
    %514 = vmatprep.subr.mxu0 0.0
    %515 = vmatpush1.msra.mxu0 %v198
    %516 = vmatprep.subr.mxu0 0.0
    %517 = vmatpush1.msra.mxu0 0.0
    %518 = vmatprep.subr.mxu0 0.0
    %519 = vmatpush1.msra.mxu0 0.0
    %520 = vmatprep.subr.mxu0 0.0
    %521 = vmatpush1.msra.mxu0 0.0
    %522 = vmatprep.subr.mxu0 0.0
    %523 = vmatpush1.msra.mxu0 0.0
    %524 = vmatprep.subr.mxu0 0.0
    %525 = vmatpush1.msra.mxu0 0.0
    %526 = vmatprep.subr.mxu0 0.0
    %527 = vmatpush1.msra.mxu0 0.0
    %528 = vmatprep.subr.mxu0 0.0
    %529 = vmatpush1.msra.mxu0 0.0
    %530 = vmatprep.subr.mxu0 0.0
    %531 = vmatpush1.msra.mxu0 0.0
    %532 = vmatprep.subr.mxu0 0.0
    %533 = vmatpush1.msra.mxu0 0.0
    %534 = vmatprep.subr.mxu0 0.0
    %535 = vmatpush1.msra.mxu0 0.0
    %536 = vmatprep.subr.mxu0 0.0
    %537 = vmatpush1.msra.mxu0 0.0
    %538 = vmatprep.subr.mxu0 0.0
    %539 = vmatpush1.msra.mxu0 0.0
    %540 = vmatprep.subr.mxu0 0.0
    %541 = vmatpush1.msra.mxu0 0.0
    %542 = vmatprep.subr.mxu0 0.0
    %543 = vmatpush1.msra.mxu0 0.0
    %544 = vmatprep.subr.mxu0 0.0
    %545 = vmatpush1.msra.mxu0 0.0
    %546 = vmatprep.subr.mxu0 0.0
    %547 = vmatpush1.msra.mxu0 0.0
    %548 = vmatprep.subr.mxu0 0.0
    %549 = vmatpush1.msra.mxu0 0.0
    %550 = vmatprep.subr.mxu0 0.0
    %551 = vmatpush1.msra.mxu0 0.0
    %552 = vmatprep.subr.mxu0 0.0
    %553 = vmatpush1.msra.mxu0 0.0
    %554 = vmatprep.subr.mxu0 0.0
    %555 = vmatpush1.msra.mxu0 0.0
    %556 = vmatprep.subr.mxu0 0.0
    %557 = vmatpush1.msra.mxu0 0.0
    %558 = vmatprep.subr.mxu0 0.0
    %559 = vmatpush1.msra.mxu0 0.0
    %560 = vmatprep.subr.mxu0 0.0
    %561 = vmatpush1.msra.mxu0 0.0
    %562 = vmatprep.subr.mxu0 0.0
    %563 = vmatpush1.msra.mxu0 0.0
    %564 = vmatprep.subr.mxu0 0.0
    %565 = vmatpush1.msra.mxu0 0.0
    %566 = vmatprep.subr.mxu0 0.0
    %567 = vmatpush1.msra.mxu0 0.0
    %568 = vmatprep.subr.mxu0 0.0
    %569 = vmatpush1.msra.mxu0 0.0
    %570 = vmatprep.subr.mxu0 0.0
    %571 = vmatpush1.msra.mxu0 0.0
    %572 = vmatprep.subr.mxu0 0.0
    %573 = vmatpush1.msra.mxu0 0.0
    %574 = vmatprep.subr.mxu0 0.0
    %575 = vmatpush1.msra.mxu0 0.0
    %576 = vmatprep.mubr.f32.mxu0 0.0
    %577 = vmatmul.mubr.f32.gmra.mrb[0].mxu0 %v246
    %v578 = vpop.f32.mrb[0].mxu0
    %v579 = vadd.f32 0.0, %v578
    %v580 = vpop.f32.mrb[0].mxu0
    %581 = vmatprep.mubr.f32.mxu0 0.0
    %582 = vmatmul.mubr.f32.gmra.mrb[0].mxu0 %v249
    %v583 = vpop.f32.mrb[0].mxu0
    %v584 = vadd.f32 0.0, %v583
    %v585 = vpop.f32.mrb[0].mxu0
    %586 = vmatprep.mubr.f32.mxu0 0.0
    %587 = vmatmul.mubr.f32.gmra.mrb[0].mxu0 %v252
    %v588 = vpop.f32.mrb[0].mxu0
    %v589 = vadd.f32 0.0, %v588
    %v590 = vpop.f32.mrb[0].mxu0
    %591 = vmatprep.mubr.f32.mxu0 0.0
    %592 = vmatmul.mubr.f32.gmra.mrb[0].mxu0 %v255
    %v593 = vpop.f32.mrb[0].mxu0
    %v594 = vadd.f32 0.0, %v593
    %v595 = vpop.f32.mrb[0].mxu0
    %596 = vdwg.mxu0
    %597 = vmatprep.subr.mxu0 0.0
    %598 = vmatpush1.msra.mxu0 %v203
    %599 = vmatprep.subr.mxu0 0.0
    %600 = vmatpush1.msra.mxu0 %v208
    %601 = vmatprep.subr.mxu0 0.0
    %602 = vmatpush1.msra.mxu0 0.0
    %603 = vmatprep.subr.mxu0 0.0
    %604 = vmatpush1.msra.mxu0 0.0
    %605 = vmatprep.subr.mxu0 0.0
    %606 = vmatpush1.msra.mxu0 0.0
    %607 = vmatprep.subr.mxu0 0.0
    %608 = vmatpush1.msra.mxu0 0.0
    %609 = vmatprep.subr.mxu0 0.0
    %610 = vmatpush1.msra.mxu0 0.0
    %611 = vmatprep.subr.mxu0 0.0
    %612 = vmatpush1.msra.mxu0 0.0
    %613 = vmatprep.subr.mxu0 0.0
    %614 = vmatpush1.msra.mxu0 0.0
    %615 = vmatprep.subr.mxu0 0.0
    %616 = vmatpush1.msra.mxu0 0.0
    %617 = vmatprep.subr.mxu0 0.0
    %618 = vmatpush1.msra.mxu0 0.0
    %619 = vmatprep.subr.mxu0 0.0
    %620 = vmatpush1.msra.mxu0 0.0
    %621 = vmatprep.subr.mxu0 0.0
    %622 = vmatpush1.msra.mxu0 0.0
    %623 = vmatprep.subr.mxu0 0.0
    %624 = vmatpush1.msra.mxu0 0.0
    %625 = vmatprep.subr.mxu0 0.0
    %626 = vmatpush1.msra.mxu0 0.0
    %627 = vmatprep.subr.mxu0 0.0
    %628 = vmatpush1.msra.mxu0 0.0
    %629 = vmatprep.subr.mxu0 0.0
    %630 = vmatpush1.msra.mxu0 0.0
    %631 = vmatprep.subr.mxu0 0.0
    %632 = vmatpush1.msra.mxu0 0.0
    %633 = vmatprep.subr.mxu0 0.0
    %634 = vmatpush1.msra.mxu0 0.0
    %635 = vmatprep.subr.mxu0 0.0
    %636 = vmatpush1.msra.mxu0 0.0
    %637 = vmatprep.subr.mxu0 0.0
    %638 = vmatpush1.msra.mxu0 0.0
    %639 = vmatprep.subr.mxu0 0.0
    %640 = vmatpush1.msra.mxu0 0.0
    %641 = vmatprep.subr.mxu0 0.0
    %642 = vmatpush1.msra.mxu0 0.0
    %643 = vmatprep.subr.mxu0 0.0
    %644 = vmatpush1.msra.mxu0 0.0
    %645 = vmatprep.subr.mxu0 0.0
    %646 = vmatpush1.msra.mxu0 0.0
    %647 = vmatprep.subr.mxu0 0.0
    %648 = vmatpush1.msra.mxu0 0.0
    %649 = vmatprep.subr.mxu0 0.0
    %650 = vmatpush1.msra.mxu0 0.0
    %651 = vmatprep.subr.mxu0 0.0
    %652 = vmatpush1.msra.mxu0 0.0
    %653 = vmatprep.subr.mxu0 0.0
    %654 = vmatpush1.msra.mxu0 0.0
    %655 = vmatprep.subr.mxu0 0.0
    %656 = vmatpush1.msra.mxu0 0.0
    %657 = vmatprep.subr.mxu0 0.0
    %658 = vmatpush1.msra.mxu0 0.0
    %659 = vmatprep.subr.mxu0 0.0
    %660 = vmatpush1.msra.mxu0 0.0
    %661 = vmatprep.mubr.f32.mxu0 0.0
    %662 = vmatmul.mubr.f32.gmra.mrb[0].mxu0 %v246
    %v663 = vpop.f32.mrb[0].mxu0
    %v664 = vadd.f32 0.0, %v663
    %v665 = vpop.f32.mrb[0].mxu0
    %666 = vmatprep.mubr.f32.mxu0 0.0
    %667 = vmatmul.mubr.f32.gmra.mrb[0].mxu0 %v249
    %v668 = vpop.f32.mrb[0].mxu0
    %v669 = vadd.f32 0.0, %v668
    %v670 = vpop.f32.mrb[0].mxu0
    %671 = vmatprep.mubr.f32.mxu0 0.0
    %672 = vmatmul.mubr.f32.gmra.mrb[0].mxu0 %v252
    %v673 = vpop.f32.mrb[0].mxu0
    %v674 = vadd.f32 0.0, %v673
    %v675 = vpop.f32.mrb[0].mxu0
    %676 = vmatprep.mubr.f32.mxu0 0.0
    %677 = vmatmul.mubr.f32.gmra.mrb[0].mxu0 %v255
    %v678 = vpop.f32.mrb[0].mxu0
    %v679 = vadd.f32 0.0, %v678
    %v680 = vpop.f32.mrb[0].mxu0
    %681 = vdwg.mxu0
    %682 = vmatprep.subr.mxu0 0.0
    %683 = vmatpush1.msra.mxu0 %v213
    %684 = vmatprep.subr.mxu0 0.0
    %685 = vmatpush1.msra.mxu0 %v218
    %686 = vmatprep.subr.mxu0 0.0
    %687 = vmatpush1.msra.mxu0 0.0
    %688 = vmatprep.subr.mxu0 0.0
    %689 = vmatpush1.msra.mxu0 0.0
    %690 = vmatprep.subr.mxu0 0.0
    %691 = vmatpush1.msra.mxu0 0.0
    %692 = vmatprep.subr.mxu0 0.0
    %693 = vmatpush1.msra.mxu0 0.0
    %694 = vmatprep.subr.mxu0 0.0
    %695 = vmatpush1.msra.mxu0 0.0
    %696 = vmatprep.subr.mxu0 0.0
    %697 = vmatpush1.msra.mxu0 0.0
    %698 = vmatprep.subr.mxu0 0.0
    %699 = vmatpush1.msra.mxu0 0.0
    %700 = vmatprep.subr.mxu0 0.0
    %701 = vmatpush1.msra.mxu0 0.0
    %702 = vmatprep.subr.mxu0 0.0
    %703 = vmatpush1.msra.mxu0 0.0
    %704 = vmatprep.subr.mxu0 0.0
    %705 = vmatpush1.msra.mxu0 0.0
    %706 = vmatprep.subr.mxu0 0.0
    %707 = vmatpush1.msra.mxu0 0.0
    %708 = vmatprep.subr.mxu0 0.0
    %709 = vmatpush1.msra.mxu0 0.0
    %710 = vmatprep.subr.mxu0 0.0
    %711 = vmatpush1.msra.mxu0 0.0
    %712 = vmatprep.subr.mxu0 0.0
    %713 = vmatpush1.msra.mxu0 0.0
    %714 = vmatprep.subr.mxu0 0.0
    %715 = vmatpush1.msra.mxu0 0.0
    %716 = vmatprep.subr.mxu0 0.0
    %717 = vmatpush1.msra.mxu0 0.0
    %718 = vmatprep.subr.mxu0 0.0
    %719 = vmatpush1.msra.mxu0 0.0
    %720 = vmatprep.subr.mxu0 0.0
    %721 = vmatpush1.msra.mxu0 0.0
    %722 = vmatprep.subr.mxu0 0.0
    %723 = vmatpush1.msra.mxu0 0.0
    %724 = vmatprep.subr.mxu0 0.0
    %725 = vmatpush1.msra.mxu0 0.0
    %726 = vmatprep.subr.mxu0 0.0
    %727 = vmatpush1.msra.mxu0 0.0
    %728 = vmatprep.subr.mxu0 0.0
    %729 = vmatpush1.msra.mxu0 0.0
    %730 = vmatprep.subr.mxu0 0.0
    %731 = vmatpush1.msra.mxu0 0.0
    %732 = vmatprep.subr.mxu0 0.0
    %733 = vmatpush1.msra.mxu0 0.0
    %734 = vmatprep.subr.mxu0 0.0
    %735 = vmatpush1.msra.mxu0 0.0
    %736 = vmatprep.subr.mxu0 0.0
    %737 = vmatpush1.msra.mxu0 0.0
    %738 = vmatprep.subr.mxu0 0.0
    %739 = vmatpush1.msra.mxu0 0.0
    %740 = vmatprep.subr.mxu0 0.0
    %741 = vmatpush1.msra.mxu0 0.0
    %742 = vmatprep.subr.mxu0 0.0
    %743 = vmatpush1.msra.mxu0 0.0
    %744 = vmatprep.subr.mxu0 0.0
    %745 = vmatpush1.msra.mxu0 0.0
    %746 = vmatprep.mubr.f32.mxu0 0.0
    %747 = vmatmul.mubr.f32.gmra.mrb[0].mxu0 %v246
    %v748 = vpop.f32.mrb[0].mxu0
    %v749 = vadd.f32 0.0, %v748
    %v750 = vpop.f32.mrb[0].mxu0
    %751 = vmatprep.mubr.f32.mxu0 0.0
    %752 = vmatmul.mubr.f32.gmra.mrb[0].mxu0 %v249
    %v753 = vpop.f32.mrb[0].mxu0
    %v754 = vadd.f32 0.0, %v753
    %v755 = vpop.f32.mrb[0].mxu0
    %756 = vmatprep.mubr.f32.mxu0 0.0
    %757 = vmatmul.mubr.f32.gmra.mrb[0].mxu0 %v252
    %v758 = vpop.f32.mrb[0].mxu0
    %v759 = vadd.f32 0.0, %v758
    %v760 = vpop.f32.mrb[0].mxu0
    %761 = vmatprep.mubr.f32.mxu0 0.0
    %762 = vmatmul.mubr.f32.gmra.mrb[0].mxu0 %v255
    %v763 = vpop.f32.mrb[0].mxu0
    %v764 = vadd.f32 0.0, %v763
    %v765 = vpop.f32.mrb[0].mxu0
    %766 = vdwg.mxu0
    %767 = vmatprep.subr.mxu0 0.0
    %768 = vmatpush1.msra.mxu0 %v223
    %769 = vmatprep.subr.mxu0 0.0
    %770 = vmatpush1.msra.mxu0 %v228
    %771 = vmatprep.subr.mxu0 0.0
    %772 = vmatpush1.msra.mxu0 0.0
    %773 = vmatprep.subr.mxu0 0.0
    %774 = vmatpush1.msra.mxu0 0.0
    %775 = vmatprep.subr.mxu0 0.0
    %776 = vmatpush1.msra.mxu0 0.0
    %777 = vmatprep.subr.mxu0 0.0
    %778 = vmatpush1.msra.mxu0 0.0
    %779 = vmatprep.subr.mxu0 0.0
    %780 = vmatpush1.msra.mxu0 0.0
    %781 = vmatprep.subr.mxu0 0.0
    %782 = vmatpush1.msra.mxu0 0.0
    %783 = vmatprep.subr.mxu0 0.0
    %784 = vmatpush1.msra.mxu0 0.0
    %785 = vmatprep.subr.mxu0 0.0
    %786 = vmatpush1.msra.mxu0 0.0
    %787 = vmatprep.subr.mxu0 0.0
    %788 = vmatpush1.msra.mxu0 0.0
    %789 = vmatprep.subr.mxu0 0.0
    %790 = vmatpush1.msra.mxu0 0.0
    %791 = vmatprep.subr.mxu0 0.0
    %792 = vmatpush1.msra.mxu0 0.0
    %793 = vmatprep.subr.mxu0 0.0
    %794 = vmatpush1.msra.mxu0 0.0
    %795 = vmatprep.subr.mxu0 0.0
    %796 = vmatpush1.msra.mxu0 0.0
    %797 = vmatprep.subr.mxu0 0.0
    %798 = vmatpush1.msra.mxu0 0.0
    %799 = vmatprep.subr.mxu0 0.0
    %800 = vmatpush1.msra.mxu0 0.0
    %801 = vmatprep.subr.mxu0 0.0
    %802 = vmatpush1.msra.mxu0 0.0
    %803 = vmatprep.subr.mxu0 0.0
    %804 = vmatpush1.msra.mxu0 0.0
    %805 = vmatprep.subr.mxu0 0.0
    %806 = vmatpush1.msra.mxu0 0.0
    %807 = vmatprep.subr.mxu0 0.0
    %808 = vmatpush1.msra.mxu0 0.0
    %809 = vmatprep.subr.mxu0 0.0
    %810 = vmatpush1.msra.mxu0 0.0
    %811 = vmatprep.subr.mxu0 0.0
    %812 = vmatpush1.msra.mxu0 0.0
    %813 = vmatprep.subr.mxu0 0.0
    %814 = vmatpush1.msra.mxu0 0.0
    %815 = vmatprep.subr.mxu0 0.0
    %816 = vmatpush1.msra.mxu0 0.0
    %817 = vmatprep.subr.mxu0 0.0
    %818 = vmatpush1.msra.mxu0 0.0
    %819 = vmatprep.subr.mxu0 0.0
    %820 = vmatpush1.msra.mxu0 0.0
    %821 = vmatprep.subr.mxu0 0.0
    %822 = vmatpush1.msra.mxu0 0.0
    %823 = vmatprep.subr.mxu0 0.0
    %824 = vmatpush1.msra.mxu0 0.0
    %825 = vmatprep.subr.mxu0 0.0
    %826 = vmatpush1.msra.mxu0 0.0
    %827 = vmatprep.subr.mxu0 0.0
    %828 = vmatpush1.msra.mxu0 0.0
    %829 = vmatprep.subr.mxu0 0.0
    %830 = vmatpush1.msra.mxu0 0.0
    %831 = vmatprep.mubr.f32.mxu0 0.0
    %832 = vmatmul.mubr.f32.gmra.mrb[0].mxu0 %v246
    %v833 = vpop.f32.mrb[0].mxu0
    %v834 = vadd.f32 0.0, %v833
    %v835 = vpop.f32.mrb[0].mxu0
    %836 = vmatprep.mubr.f32.mxu0 0.0
    %837 = vmatmul.mubr.f32.gmra.mrb[0].mxu0 %v249
    %v838 = vpop.f32.mrb[0].mxu0
    %v839 = vadd.f32 0.0, %v838
    %v840 = vpop.f32.mrb[0].mxu0
    %841 = vmatprep.mubr.f32.mxu0 0.0
    %842 = vmatmul.mubr.f32.gmra.mrb[0].mxu0 %v252
    %v843 = vpop.f32.mrb[0].mxu0
    %v844 = vadd.f32 0.0, %v843
    %v845 = vpop.f32.mrb[0].mxu0
    %846 = vmatprep.mubr.f32.mxu0 0.0
    %847 = vmatmul.mubr.f32.gmra.mrb[0].mxu0 %v255
    %v848 = vpop.f32.mrb[0].mxu0
    %v849 = vadd.f32 0.0, %v848
    %v850 = vpop.f32.mrb[0].mxu0
    %851 = vdwg.mxu0
    %852 = vmatprep.subr.mxu0 0.0
    %853 = vmatpush1.msra.mxu0 %v233
    %854 = vmatprep.subr.mxu0 0.0
    %855 = vmatpush1.msra.mxu0 %v238
    %856 = vmatprep.subr.mxu0 0.0
    %857 = vmatpush1.msra.mxu0 0.0
    %858 = vmatprep.subr.mxu0 0.0
    %859 = vmatpush1.msra.mxu0 0.0
    %860 = vmatprep.subr.mxu0 0.0
    %861 = vmatpush1.msra.mxu0 0.0
    %862 = vmatprep.subr.mxu0 0.0
    %863 = vmatpush1.msra.mxu0 0.0
    %864 = vmatprep.subr.mxu0 0.0
    %865 = vmatpush1.msra.mxu0 0.0
    %866 = vmatprep.subr.mxu0 0.0
    %867 = vmatpush1.msra.mxu0 0.0
    %868 = vmatprep.subr.mxu0 0.0
    %869 = vmatpush1.msra.mxu0 0.0
    %870 = vmatprep.subr.mxu0 0.0
    %871 = vmatpush1.msra.mxu0 0.0
    %872 = vmatprep.subr.mxu0 0.0
    %873 = vmatpush1.msra.mxu0 0.0
    %874 = vmatprep.subr.mxu0 0.0
    %875 = vmatpush1.msra.mxu0 0.0
    %876 = vmatprep.subr.mxu0 0.0
    %877 = vmatpush1.msra.mxu0 0.0
    %878 = vmatprep.subr.mxu0 0.0
    %879 = vmatpush1.msra.mxu0 0.0
    %880 = vmatprep.subr.mxu0 0.0
    %881 = vmatpush1.msra.mxu0 0.0
    %882 = vmatprep.subr.mxu0 0.0
    %883 = vmatpush1.msra.mxu0 0.0
    %884 = vmatprep.subr.mxu0 0.0
    %885 = vmatpush1.msra.mxu0 0.0
    %886 = vmatprep.subr.mxu0 0.0
    %887 = vmatpush1.msra.mxu0 0.0
    %888 = vmatprep.subr.mxu0 0.0
    %889 = vmatpush1.msra.mxu0 0.0
    %890 = vmatprep.subr.mxu0 0.0
    %891 = vmatpush1.msra.mxu0 0.0
    %892 = vmatprep.subr.mxu0 0.0
    %893 = vmatpush1.msra.mxu0 0.0
    %894 = vmatprep.subr.mxu0 0.0
    %895 = vmatpush1.msra.mxu0 0.0
    %896 = vmatprep.subr.mxu0 0.0
    %897 = vmatpush1.msra.mxu0 0.0
    %898 = vmatprep.subr.mxu0 0.0
    %899 = vmatpush1.msra.mxu0 0.0
    %900 = vmatprep.subr.mxu0 0.0
    %901 = vmatpush1.msra.mxu0 0.0
    %902 = vmatprep.subr.mxu0 0.0
    %903 = vmatpush1.msra.mxu0 0.0
    %904 = vmatprep.subr.mxu0 0.0
    %905 = vmatpush1.msra.mxu0 0.0
    %906 = vmatprep.subr.mxu0 0.0
    %907 = vmatpush1.msra.mxu0 0.0
    %908 = vmatprep.subr.mxu0 0.0
    %909 = vmatpush1.msra.mxu0 0.0
    %910 = vmatprep.subr.mxu0 0.0
    %911 = vmatpush1.msra.mxu0 0.0
    %912 = vmatprep.subr.mxu0 0.0
    %913 = vmatpush1.msra.mxu0 0.0
    %914 = vmatprep.subr.mxu0 0.0
    %915 = vmatpush1.msra.mxu0 0.0
    %916 = vmatprep.mubr.f32.mxu0 0.0
    %917 = vmatmul.mubr.f32.gmra.mrb[0].mxu0 %v246
    %v918 = vpop.f32.mrb[0].mxu0
    %v919 = vadd.f32 0.0, %v918
    %v920 = vpop.f32.mrb[0].mxu0
    %921 = vmatprep.mubr.f32.mxu0 0.0
    %922 = vmatmul.mubr.f32.gmra.mrb[0].mxu0 %v249
    %v923 = vpop.f32.mrb[0].mxu0
    %v924 = vadd.f32 0.0, %v923
    %v925 = vpop.f32.mrb[0].mxu0
    %926 = vmatprep.mubr.f32.mxu0 0.0
    %927 = vmatmul.mubr.f32.gmra.mrb[0].mxu0 %v252
    %v928 = vpop.f32.mrb[0].mxu0
    %v929 = vadd.f32 0.0, %v928
    %v930 = vpop.f32.mrb[0].mxu0
    %931 = vmatprep.mubr.f32.mxu0 0.0
    %932 = vmatmul.mubr.f32.gmra.mrb[0].mxu0 %v255
    %v933 = vpop.f32.mrb[0].mxu0
    %v934 = vadd.f32 0.0, %v933
    %v935 = vpop.f32.mrb[0].mxu0
    %936 = vdwg.mxu0
    %937 = vst [vmem:[#allocation5] sm:$0xff] %v324
    %938 = vst [vmem:[#allocation5 + $0x8] sm:$0xff] %v329
    %939 = vst [vmem:[#allocation5 + $0x10] sm:$0xff] %v334
    %940 = vst [vmem:[#allocation5 + $0x18] sm:$0xff] %v339
    %941 = vst [vmem:[#allocation5 + $0x20] sm:$0xff] %v409
    %942 = vst [vmem:[#allocation5 + $0x28] sm:$0xff] %v414
    %943 = vst [vmem:[#allocation5 + $0x30] sm:$0xff] %v419
    %944 = vst [vmem:[#allocation5 + $0x38] sm:$0xff] %v424
    %945 = vst [vmem:[#allocation5 + $0x40] sm:$0xff] %v494
    %946 = vst [vmem:[#allocation5 + $0x48] sm:$0xff] %v499
    %947 = vst [vmem:[#allocation5 + $0x50] sm:$0xff] %v504
    %948 = vst [vmem:[#allocation5 + $0x58] sm:$0xff] %v509
    %949 = vst [vmem:[#allocation5 + $0x60] sm:$0xff] %v579
    %950 = vst [vmem:[#allocation5 + $0x68] sm:$0xff] %v584
    %951 = vst [vmem:[#allocation5 + $0x70] sm:$0xff] %v589
    %952 = vst [vmem:[#allocation5 + $0x78] sm:$0xff] %v594
    %953 = vst [vmem:[#allocation5 + $0x80] sm:$0xff] %v664
    %954 = vst [vmem:[#allocation5 + $0x88] sm:$0xff] %v669
    %955 = vst [vmem:[#allocation5 + $0x90] sm:$0xff] %v674
    %956 = vst [vmem:[#allocation5 + $0x98] sm:$0xff] %v679
    %957 = vst [vmem:[#allocation5 + $0xa0] sm:$0xff] %v749
    %958 = vst [vmem:[#allocation5 + $0xa8] sm:$0xff] %v754
    %959 = vst [vmem:[#allocation5 + $0xb0] sm:$0xff] %v759
    %960 = vst [vmem:[#allocation5 + $0xb8] sm:$0xff] %v764
    %961 = vst [vmem:[#allocation5 + $0xc0] sm:$0xff] %v834
    %962 = vst [vmem:[#allocation5 + $0xc8] sm:$0xff] %v839
    %963 = vst [vmem:[#allocation5 + $0xd0] sm:$0xff] %v844
    %964 = vst [vmem:[#allocation5 + $0xd8] sm:$0xff] %v849
    %965 = vst [vmem:[#allocation5 + $0xe0] sm:$0xff] %v919
    %966 = vst [vmem:[#allocation5 + $0xe8] sm:$0xff] %v924
    %967 = vst [vmem:[#allocation5 + $0xf0] sm:$0xff] %v929
    %968 = vst [vmem:[#allocation5 + $0xf8] sm:$0xff] %v934
    // Predicated region
    $region18: #{tpu_custom_call.1} parent=1 // pred_check
      _
    $region19: #{tpu_custom_call.1} parent=1 // pred_check_branch
      %970 = sbr.rel (0) target = $region21
    $region20: #{tpu_custom_call.1} parent=1 // pred_region
      %s972 = ssub.s32 4096, 4096
      %973 = vsyncadd [#allocation4], %s972
      %s974 = sshll.u32 [#allocation5], 4
      %s975 = int_to_ptr.vmem [resolvable:$true] %s974
      %980 = dma.vmem_to_hbm [thread:$0]  %s975, 4096, %s3, [#allocation4], 128, 128, 8
    $region21: #{tpu_custom_call.1} parent=1 // pred_fallthru
      _
    // Predicated region
    $region22: #{tpu_custom_call.1} parent=1 // pred_check
      _
    $region23: #{tpu_custom_call.1} parent=1 // pred_check_branch
      %982 = sbr.rel (0) target = $region25
    $region24: #{tpu_custom_call.1} parent=1 // pred_region
      %983 = dma.done [#allocation4], 4096
    $region25: #{tpu_custom_call.1} parent=1 // pred_fallthru
      _
    %984 = vsyncpa [#allocation3], 1
    %985 = vsyncpa [#allocation4], 1

</llo_original>
